<compile_context>
chip_gen: v5e
topology: v5e:2x2
jax: 0.10.0
libtpu: 0.0.40
codegen_flags: <defaults>
</compile_context>

<pallas_src>
import functools

import jax
import jax.numpy as jnp
from jax import lax
from jax.experimental import pallas as pl
from jax.experimental.pallas import tpu as pltpu

_LANES = 128


def _round_up(x, m):
    return ((x + m - 1) // m) * m


def _cdiv(a, b):
    return (a + b - 1) // b


# ----------------------------------------------------------------------------
# Kernels
# ----------------------------------------------------------------------------
def _layernorm_rowwise_kernel(x_ref, gamma_ref, beta_ref, o_ref, *, eps, inv_h):
    """General path: one logical row per block row; reduce over full last axis."""
    x = x_ref[...].astype(jnp.float32)                       # (tr, H)
    # Two-pass statistics over the VMEM-resident tile (extra VPU/XLU pass is
    # hidden under the HBM DMA; avoids E[x^2]-mean^2 cancellation).
    mean = jnp.sum(x, axis=-1, keepdims=True) * inv_h
    xc = x - mean
    var = jnp.sum(xc * xc, axis=-1, keepdims=True) * inv_h   # unbiased=False
    inv_std = lax.rsqrt(var + eps)                           # EUP
    o_ref[...] = (gamma_ref[...] * (xc * inv_std) + beta_ref[...]).astype(o_ref.dtype)


def _layernorm_packed_kernel(x_ref, gamma_ref, beta_ref, seg_ref, o_ref, *, eps, inv_h):
    """Lane-dense path for H < 128 with 128 % H == 0: each 128-lane row holds
    G = 128//H logical rows. Segmented reductions run on the idle MXU via a
    constant 0/1 segment-sum matrix (x @ seg broadcasts each segment's sum
    across its own H lanes). HIGHEST precision keeps f32 accuracy."""
    x = x_ref[...].astype(jnp.float32)                       # (tr, 128)
    seg = seg_ref[...]                                       # (128, 128) 0/1 f32
    mean = jnp.dot(x, seg, preferred_element_type=jnp.float32,
                   precision=lax.Precision.HIGHEST) * inv_h
    xc = x - mean
    var = jnp.dot(xc * xc, seg, preferred_element_type=jnp.float32,
                  precision=lax.Precision.HIGHEST) * inv_h
    inv_std = lax.rsqrt(var + eps)
    o_ref[...] = (gamma_ref[...] * (xc * inv_std) + beta_ref[...]).astype(o_ref.dtype)


# ----------------------------------------------------------------------------
# Wrapper helpers
# ----------------------------------------------------------------------------
def _vmem_budget_bytes():
    try:
        cap = pltpu.get_tpu_info().vmem_capacity_bytes
    except Exception:
        cap = 64 * 1024 * 1024  # conservative: v7x physical VMEM
    # <= half of physical VMEM, capped at 48 MiB (v5e/v6e have 128 MiB).
    return int(min(cap // 2, 48 * 1024 * 1024))


def _pick_tile_rows(n_rows, row_io_bytes, row_f32_bytes, vmem_budget):
    # Bandwidth target: ~4 MiB x block (step overhead ~0.35 us becomes <~12%
    # even at v7x's 3.2 TB/s; comfortably past the roofline knee on v5e/v6e).
    target_block_bytes = 4 * 1024 * 1024
    tr = max(1, target_block_bytes // row_io_bytes)
    # Dtype-aware VMEM accounting: double-buffered in+out blocks in the I/O
    # dtype (4 blocks) plus ~6 f32-sized temporaries (upcast x, centered x, ...).
    per_row_vmem = 4 * row_io_bytes + 6 * row_f32_bytes
    tr = min(tr, max(8, (vmem_budget - (2 << 20)) // per_row_vmem))
    # Prefer >= 8 grid steps (>= 4 per TensorCore on v7x) for core sharding and
    # pipeline overlap, but never shrink blocks below ~512 KiB.
    rows_for_8_steps = _round_up(max(_cdiv(n_rows, 8), 1), 8)
    rows_floor = max(8, _round_up(_cdiv(512 * 1024, row_io_bytes), 8))
    tr = min(tr, max(rows_for_8_steps, rows_floor))
    tr = max(8, (tr // 8) * 8)        # sublane-aligned
    if n_rows <= tr:
        tr = n_rows                    # single block == full extent (always legal)
    return tr


def _vmem_limit(tr, row_io_bytes, row_f32_bytes, vmem_budget):
    est = 4 * tr * row_io_bytes + 6 * tr * row_f32_bytes + (2 << 20)
    return int(min(vmem_budget, max(est, 16 << 20)))


def _call(kernel, args, in_specs, out_shape, out_spec, grid, vmem_limit):
    def build(sem):
        return pl.pallas_call(
            kernel,
            out_shape=out_shape,
            grid_spec=pltpu.PrefetchScalarGridSpec(
                num_scalar_prefetch=0,
                grid=grid,
                in_specs=in_specs,
                out_specs=out_spec,
            ),
            compiler_params=pltpu.CompilerParams(
                dimension_semantics=(sem,),
                vmem_limit_bytes=vmem_limit,
            ),
        )(*args)

    # CORE_PARALLEL actually shards the row axis across v7x's 2 TensorCores
    # (plain "parallel" has near-zero codegen effect). Fall back gracefully on
    # chips / runtimes that reject it.
    sem = getattr(pltpu, "CORE_PARALLEL", "parallel")
    if sem != "parallel":
        try:
            return build(sem)
        except Exception:
            pass
    return build("parallel")


def _layer_norm_rowwise(x2d, gamma_f32, beta_f32, eps):
    n_rows, H = x2d.shape
    vmem_budget = _vmem_budget_bytes()
    row_io = H * jnp.dtype(x2d.dtype).itemsize
    row_f32 = H * 4
    tr = _pick_tile_rows(n_rows, row_io, row_f32, vmem_budget)
    grid = (_cdiv(n_rows, tr),)        # edge block masked by the pipeline: no pad/slice
    return _call(
        functools.partial(_layernorm_rowwise_kernel, eps=eps, inv_h=1.0 / H),
        (x2d, gamma_f32.reshape(1, H), beta_f32.reshape(1, H)),
        in_specs=[
            pl.BlockSpec((tr, H), lambda i: (i, 0)),
            pl.BlockSpec((1, H), lambda i: (0, 0)),
            pl.BlockSpec((1, H), lambda i: (0, 0)),
        ],
        out_shape=jax.ShapeDtypeStruct((n_rows, H), x2d.dtype),
        out_spec=pl.BlockSpec((tr, H), lambda i: (i, 0)),
        grid=grid,
        vmem_limit=_vmem_limit(tr, row_io, row_f32, vmem_budget),
    )


def _layer_norm_packed(x2d_packed, gamma_f32, beta_f32, eps, H):
    rows_k = x2d_packed.shape[0]
    G = _LANES // H
    vmem_budget = _vmem_budget_bytes()
    row_io = _LANES * jnp.dtype(x2d_packed.dtype).itemsize
    row_f32 = _LANES * 4
    tr = _pick_tile_rows(rows_k, row_io, row_f32, vmem_budget)
    grid = (_cdiv(rows_k, tr),)

    # Constant, VMEM-resident operands (loaded once; constant index_map).
    gamma_t = jnp.tile(gamma_f32, G).reshape(1, _LANES)
    beta_t = jnp.tile(beta_f32, G).reshape(1, _LANES)
    seg_id = jnp.arange(_LANES) // H
    seg = (seg_id[:, None] == seg_id[None, :]).astype(jnp.float32)

    return _call(
        functools.partial(_layernorm_packed_kernel, eps=eps, inv_h=1.0 / H),
        (x2d_packed, gamma_t, beta_t, seg),
        in_specs=[
            pl.BlockSpec((tr, _LANES), lambda i: (i, 0)),
            pl.BlockSpec((1, _LANES), lambda i: (0, 0)),
            pl.BlockSpec((1, _LANES), lambda i: (0, 0)),
            pl.BlockSpec((_LANES, _LANES), lambda i: (0, 0)),
        ],
        out_shape=jax.ShapeDtypeStruct((rows_k, _LANES), x2d_packed.dtype),
        out_spec=pl.BlockSpec((tr, _LANES), lambda i: (i, 0)),
        grid=grid,
        vmem_limit=_vmem_limit(tr, row_io, row_f32, vmem_budget),
    )


def layer_norm(x, gamma, beta, *, eps=1e-12):
    """LayerNorm over the last axis. x: (..., H); gamma/beta: (H,)."""
    orig_shape = x.shape
    H = orig_shape[-1]
    n_rows = 1
    for d in orig_shape[:-1]:
        n_rows *= d

    gamma_f32 = gamma.astype(jnp.float32)
    beta_f32 = beta.astype(jnp.float32)

    # Lane-dense packing for small H (the module's toy H=32): fold 128/H rows
    # into each 128-lane row via a free contiguous reshape (no pad).
    use_packed = (0 < H < _LANES) and (_LANES % H == 0) and ((n_rows * H) % _LANES == 0)
    if use_packed:
        try:
            rows_k = (n_rows * H) // _LANES
            out = _layer_norm_packed(x.reshape(rows_k, _LANES), gamma_f32,
                                     beta_f32, eps, H)
            return out.reshape(orig_shape)
        except Exception:
            pass  # fall back to the general row-wise path

    out2d = _layer_norm_rowwise(x.reshape(n_rows, H), gamma_f32, beta_f32, eps)
    return out2d.reshape(orig_shape)


if __name__ == "__main__":
    key = jax.random.PRNGKey(0)
    batch, seq, hidden = 2, 8, 32
    eps = 1e-12

    x = jax.random.normal(key, (batch, seq, hidden), dtype=jnp.float32)
    # Deterministic parameter init matching nn.Parameter(torch.ones / zeros)
    gamma = jnp.ones((hidden,), dtype=jnp.float32)
    beta = jnp.zeros((hidden,), dtype=jnp.float32)

    out = layer_norm(x, gamma, beta, eps=eps)
    out = jax.block_until_ready(out)

    # Pure-JAX reference (torch semantics: mean + unbiased=False variance)
    mean = jnp.mean(x, axis=-1, keepdims=True)
    var = jnp.mean((x - mean) ** 2, axis=-1, keepdims=True)
    ref = gamma * ((x - mean) / jnp.sqrt(var + eps)) + beta
    assert out.shape == x.shape
    assert jnp.allclose(out, ref, atol=1e-5, rtol=1e-5), "mismatch vs reference"

    print("KERNEL_OK")
</pallas_src>

<mosaic_0001>
module attributes {stable_mosaic.version = 11 : i64} {
  func.func @_layernorm_packed_kernel(%arg0: i32, %arg1: memref<4x128xf32, #tpu.memory_space<vmem>>, %arg2: memref<1x128xf32, #tpu.memory_space<vmem>>, %arg3: memref<1x128xf32, #tpu.memory_space<vmem>>, %arg4: memref<128x128xf32, #tpu.memory_space<vmem>>, %arg5: memref<4x128xf32, #tpu.memory_space<vmem>>) attributes {dimension_semantics = [#tpu.dimension_semantics<core_parallel>], iteration_bounds = array<i64: 1>, scalar_prefetch = 0 : i64, scratch_operands = 0 : i64, tpu.core_type = #tpu.core_type<tc>, window_params = [{transform_indices = @transform_0, window_bounds = array<i64: 4, 128>}, {pipeline_mode = #tpu.pipeline_mode<synchronous>, transform_indices = @transform_1, window_bounds = array<i64: 1, 128>}, {pipeline_mode = #tpu.pipeline_mode<synchronous>, transform_indices = @transform_2, window_bounds = array<i64: 1, 128>}, {pipeline_mode = #tpu.pipeline_mode<synchronous>, transform_indices = @transform_3, window_bounds = array<i64: 128, 128>}, {transform_indices = @transform_4, window_bounds = array<i64: 4, 128>}]} {
    %c0 = arith.constant 0 : index
    %c0_0 = arith.constant 0 : index
    %0 = vector.load %arg1[%c0, %c0_0] : memref<4x128xf32, #tpu.memory_space<vmem>>, vector<4x128xf32>
    %c0_1 = arith.constant 0 : index
    %c0_2 = arith.constant 0 : index
    %1 = vector.load %arg4[%c0_1, %c0_2] : memref<128x128xf32, #tpu.memory_space<vmem>>, vector<128x128xf32>
    %cst = arith.constant dense<0.000000e+00> : vector<4x128xf32>
    %2 = tpu.matmul %0, %1, %cst {dimension_numbers = #tpu.dot_dimension_numbers<[1], [0], [0], [1], [0, 0, 1, 1], [], []>, precision = #tpu.contract_precision<fp32>} : vector<4x128xf32>, vector<128x128xf32>, vector<4x128xf32> -> vector<4x128xf32>
    %cst_3 = arith.constant 3.125000e-02 : f32
    %3 = vector.broadcast %cst_3 : f32 to vector<4x128xf32>
    %4 = arith.mulf %2, %3 : vector<4x128xf32>
    %5 = arith.subf %0, %4 : vector<4x128xf32>
    %6 = arith.mulf %5, %5 : vector<4x128xf32>
    %cst_4 = arith.constant dense<0.000000e+00> : vector<4x128xf32>
    %7 = tpu.matmul %6, %1, %cst_4 {dimension_numbers = #tpu.dot_dimension_numbers<[1], [0], [0], [1], [0, 0, 1, 1], [], []>, precision = #tpu.contract_precision<fp32>} : vector<4x128xf32>, vector<128x128xf32>, vector<4x128xf32> -> vector<4x128xf32>
    %cst_5 = arith.constant 3.125000e-02 : f32
    %8 = vector.broadcast %cst_5 : f32 to vector<4x128xf32>
    %9 = arith.mulf %7, %8 : vector<4x128xf32>
    %cst_6 = arith.constant 9.99999996E-13 : f32
    %10 = vector.broadcast %cst_6 : f32 to vector<4x128xf32>
    %11 = arith.addf %9, %10 : vector<4x128xf32>
    %12 = math.rsqrt %11 : vector<4x128xf32>
    %c0_7 = arith.constant 0 : index
    %c0_8 = arith.constant 0 : index
    %13 = vector.load %arg2[%c0_7, %c0_8] : memref<1x128xf32, #tpu.memory_space<vmem>>, vector<1x128xf32>
    %14 = arith.mulf %5, %12 : vector<4x128xf32>
    %15 = vector.broadcast %13 : vector<1x128xf32> to vector<4x128xf32>
    %16 = arith.mulf %15, %14 : vector<4x128xf32>
    %c0_9 = arith.constant 0 : index
    %c0_10 = arith.constant 0 : index
    %17 = vector.load %arg3[%c0_9, %c0_10] : memref<1x128xf32, #tpu.memory_space<vmem>>, vector<1x128xf32>
    %18 = vector.broadcast %17 : vector<1x128xf32> to vector<4x128xf32>
    %19 = arith.addf %16, %18 : vector<4x128xf32>
    %c0_11 = arith.constant 0 : index
    %c0_12 = arith.constant 0 : index
    %20 = vector.load %arg5[%c0_11, %c0_12] : memref<4x128xf32, #tpu.memory_space<vmem>>, vector<4x128xf32>
    tpu.vector_store %arg5[%c0_11, %c0_12], %19 {strides = array<i32>} : memref<4x128xf32, #tpu.memory_space<vmem>>, vector<4x128xf32>,
    return
  }
  func.func @transform_0(%arg0: i32) -> (i32, i32) {
    %c0_i32 = arith.constant 0 : i32
    %c0_i32_0 = arith.constant 0 : i32
    return %arg0, %c0_i32 : i32, i32
  }
  func.func @transform_1(%arg0: i32) -> (i32, i32) {
    %c0_i32 = arith.constant 0 : i32
    %c0_i32_0 = arith.constant 0 : i32
    %c0_i32_1 = arith.constant 0 : i32
    return %c0_i32, %c0_i32_0 : i32, i32
  }
  func.func @transform_2(%arg0: i32) -> (i32, i32) {
    %c0_i32 = arith.constant 0 : i32
    %c0_i32_0 = arith.constant 0 : i32
    %c0_i32_1 = arith.constant 0 : i32
    return %c0_i32, %c0_i32_0 : i32, i32
  }
  func.func @transform_3(%arg0: i32) -> (i32, i32) {
    %c0_i32 = arith.constant 0 : i32
    %c0_i32_0 = arith.constant 0 : i32
    %c0_i32_1 = arith.constant 0 : i32
    return %c0_i32, %c0_i32_0 : i32, i32
  }
  func.func @transform_4(%arg0: i32) -> (i32, i32) {
    %c0_i32 = arith.constant 0 : i32
    %c0_i32_0 = arith.constant 0 : i32
    return %arg0, %c0_i32 : i32, i32
  }
}

module attributes {stable_mosaic.version = 11 : i64} {
  func.func @_layernorm_packed_kernel(%arg0: i32, %arg1: memref<4x128xf32, #tpu.memory_space<vmem>>, %arg2: memref<1x128xf32, #tpu.memory_space<vmem>>, %arg3: memref<1x128xf32, #tpu.memory_space<vmem>>, %arg4: memref<128x128xf32, #tpu.memory_space<vmem>>, %arg5: memref<4x128xf32, #tpu.memory_space<vmem>>) attributes {dimension_semantics = [#tpu.dimension_semantics<parallel>], iteration_bounds = array<i64: 1>, scalar_prefetch = 0 : i64, scratch_operands = 0 : i64, tpu.core_type = #tpu.core_type<tc>, window_params = [{transform_indices = @transform_0, window_bounds = array<i64: 4, 128>}, {pipeline_mode = #tpu.pipeline_mode<synchronous>, transform_indices = @transform_1, window_bounds = array<i64: 1, 128>}, {pipeline_mode = #tpu.pipeline_mode<synchronous>, transform_indices = @transform_2, window_bounds = array<i64: 1, 128>}, {pipeline_mode = #tpu.pipeline_mode<synchronous>, transform_indices = @transform_3, window_bounds = array<i64: 128, 128>}, {transform_indices = @transform_4, window_bounds = array<i64: 4, 128>}]} {
    %c0 = arith.constant 0 : index
    %c0_0 = arith.constant 0 : index
    %0 = vector.load %arg1[%c0, %c0_0] : memref<4x128xf32, #tpu.memory_space<vmem>>, vector<4x128xf32>
    %c0_1 = arith.constant 0 : index
    %c0_2 = arith.constant 0 : index
    %1 = vector.load %arg4[%c0_1, %c0_2] : memref<128x128xf32, #tpu.memory_space<vmem>>, vector<128x128xf32>
    %cst = arith.constant dense<0.000000e+00> : vector<4x128xf32>
    %2 = tpu.matmul %0, %1, %cst {dimension_numbers = #tpu.dot_dimension_numbers<[1], [0], [0], [1], [0, 0, 1, 1], [], []>, precision = #tpu.contract_precision<fp32>} : vector<4x128xf32>, vector<128x128xf32>, vector<4x128xf32> -> vector<4x128xf32>
    %cst_3 = arith.constant 3.125000e-02 : f32
    %3 = vector.broadcast %cst_3 : f32 to vector<4x128xf32>
    %4 = arith.mulf %2, %3 : vector<4x128xf32>
    %5 = arith.subf %0, %4 : vector<4x128xf32>
    %6 = arith.mulf %5, %5 : vector<4x128xf32>
    %cst_4 = arith.constant dense<0.000000e+00> : vector<4x128xf32>
    %7 = tpu.matmul %6, %1, %cst_4 {dimension_numbers = #tpu.dot_dimension_numbers<[1], [0], [0], [1], [0, 0, 1, 1], [], []>, precision = #tpu.contract_precision<fp32>} : vector<4x128xf32>, vector<128x128xf32>, vector<4x128xf32> -> vector<4x128xf32>
    %cst_5 = arith.constant 3.125000e-02 : f32
    %8 = vector.broadcast %cst_5 : f32 to vector<4x128xf32>
    %9 = arith.mulf %7, %8 : vector<4x128xf32>
    %cst_6 = arith.constant 9.99999996E-13 : f32
    %10 = vector.broadcast %cst_6 : f32 to vector<4x128xf32>
    %11 = arith.addf %9, %10 : vector<4x128xf32>
    %12 = math.rsqrt %11 : vector<4x128xf32>
    %c0_7 = arith.constant 0 : index
    %c0_8 = arith.constant 0 : index
    %13 = vector.load %arg2[%c0_7, %c0_8] : memref<1x128xf32, #tpu.memory_space<vmem>>, vector<1x128xf32>
    %14 = arith.mulf %5, %12 : vector<4x128xf32>
    %15 = vector.broadcast %13 : vector<1x128xf32> to vector<4x128xf32>
    %16 = arith.mulf %15, %14 : vector<4x128xf32>
    %c0_9 = arith.constant 0 : index
    %c0_10 = arith.constant 0 : index
    %17 = vector.load %arg3[%c0_9, %c0_10] : memref<1x128xf32, #tpu.memory_space<vmem>>, vector<1x128xf32>
    %18 = vector.broadcast %17 : vector<1x128xf32> to vector<4x128xf32>
    %19 = arith.addf %16, %18 : vector<4x128xf32>
    %c0_11 = arith.constant 0 : index
    %c0_12 = arith.constant 0 : index
    %20 = vector.load %arg5[%c0_11, %c0_12] : memref<4x128xf32, #tpu.memory_space<vmem>>, vector<4x128xf32>
    tpu.vector_store %arg5[%c0_11, %c0_12], %19 {strides = array<i32>} : memref<4x128xf32, #tpu.memory_space<vmem>>, vector<4x128xf32>,
    return
  }
  func.func @transform_0(%arg0: i32) -> (i32, i32) {
    %c0_i32 = arith.constant 0 : i32
    %c0_i32_0 = arith.constant 0 : i32
    return %arg0, %c0_i32 : i32, i32
  }
  func.func @transform_1(%arg0: i32) -> (i32, i32) {
    %c0_i32 = arith.constant 0 : i32
    %c0_i32_0 = arith.constant 0 : i32
    %c0_i32_1 = arith.constant 0 : i32
    return %c0_i32, %c0_i32_0 : i32, i32
  }
  func.func @transform_2(%arg0: i32) -> (i32, i32) {
    %c0_i32 = arith.constant 0 : i32
    %c0_i32_0 = arith.constant 0 : i32
    %c0_i32_1 = arith.constant 0 : i32
    return %c0_i32, %c0_i32_0 : i32, i32
  }
  func.func @transform_3(%arg0: i32) -> (i32, i32) {
    %c0_i32 = arith.constant 0 : i32
    %c0_i32_0 = arith.constant 0 : i32
    %c0_i32_1 = arith.constant 0 : i32
    return %c0_i32, %c0_i32_0 : i32, i32
  }
  func.func @transform_4(%arg0: i32) -> (i32, i32) {
    %c0_i32 = arith.constant 0 : i32
    %c0_i32_0 = arith.constant 0 : i32
    return %arg0, %c0_i32 : i32, i32
  }
}

module attributes {stable_mosaic.version = 11 : i64} {
  func.func @_layernorm_rowwise_kernel(%arg0: i32, %arg1: memref<16x32xf32, #tpu.memory_space<vmem>>, %arg2: memref<1x32xf32, #tpu.memory_space<vmem>>, %arg3: memref<1x32xf32, #tpu.memory_space<vmem>>, %arg4: memref<16x32xf32, #tpu.memory_space<vmem>>) attributes {dimension_semantics = [#tpu.dimension_semantics<core_parallel>], iteration_bounds = array<i64: 1>, scalar_prefetch = 0 : i64, scratch_operands = 0 : i64, tpu.core_type = #tpu.core_type<tc>, window_params = [{transform_indices = @transform_0, window_bounds = array<i64: 16, 32>}, {pipeline_mode = #tpu.pipeline_mode<synchronous>, transform_indices = @transform_1, window_bounds = array<i64: 1, 32>}, {pipeline_mode = #tpu.pipeline_mode<synchronous>, transform_indices = @transform_2, window_bounds = array<i64: 1, 32>}, {transform_indices = @transform_3, window_bounds = array<i64: 16, 32>}]} {
    %c0 = arith.constant 0 : index
    %c0_0 = arith.constant 0 : index
    %0 = vector.load %arg1[%c0, %c0_0] : memref<16x32xf32, #tpu.memory_space<vmem>>, vector<16x32xf32>
    %cst = arith.constant dense<0.000000e+00> : vector<16xf32>
    %1 = vector.multi_reduction <add>, %0, %cst [1] : vector<16x32xf32> to vector<16xf32>
    %2 = vector.shape_cast %1 : vector<16xf32> to vector<16x1xf32>
    %cst_1 = arith.constant 3.125000e-02 : f32
    %3 = vector.broadcast %cst_1 : f32 to vector<16x1xf32>
    %4 = arith.mulf %2, %3 : vector<16x1xf32>
    %5 = vector.broadcast %4 : vector<16x1xf32> to vector<16x32xf32>
    %6 = arith.subf %0, %5 : vector<16x32xf32>
    %7 = arith.mulf %6, %6 : vector<16x32xf32>
    %cst_2 = arith.constant dense<0.000000e+00> : vector<16xf32>
    %8 = vector.multi_reduction <add>, %7, %cst_2 [1] : vector<16x32xf32> to vector<16xf32>
    %9 = vector.shape_cast %8 : vector<16xf32> to vector<16x1xf32>
    %cst_3 = arith.constant 3.125000e-02 : f32
    %10 = vector.broadcast %cst_3 : f32 to vector<16x1xf32>
    %11 = arith.mulf %9, %10 : vector<16x1xf32>
    %cst_4 = arith.constant 9.99999996E-13 : f32
    %12 = vector.broadcast %cst_4 : f32 to vector<16x1xf32>
    %13 = arith.addf %11, %12 : vector<16x1xf32>
    %14 = math.rsqrt %13 : vector<16x1xf32>
    %c0_5 = arith.constant 0 : index
    %c0_6 = arith.constant 0 : index
    %15 = vector.load %arg2[%c0_5, %c0_6] : memref<1x32xf32, #tpu.memory_space<vmem>>, vector<1x32xf32>
    %16 = vector.broadcast %14 : vector<16x1xf32> to vector<16x32xf32>
    %17 = arith.mulf %6, %16 : vector<16x32xf32>
    %18 = vector.broadcast %15 : vector<1x32xf32> to vector<16x32xf32>
    %19 = arith.mulf %18, %17 : vector<16x32xf32>
    %c0_7 = arith.constant 0 : index
    %c0_8 = arith.constant 0 : index
    %20 = vector.load %arg3[%c0_7, %c0_8] : memref<1x32xf32, #tpu.memory_space<vmem>>, vector<1x32xf32>
    %21 = vector.broadcast %20 : vector<1x32xf32> to vector<16x32xf32>
    %22 = arith.addf %19, %21 : vector<16x32xf32>
    %c0_9 = arith.constant 0 : index
    %c0_10 = arith.constant 0 : index
    %23 = vector.load %arg4[%c0_9, %c0_10] : memref<16x32xf32, #tpu.memory_space<vmem>>, vector<16x32xf32>
    tpu.vector_store %arg4[%c0_9, %c0_10], %22 {strides = array<i32>} : memref<16x32xf32, #tpu.memory_space<vmem>>, vector<16x32xf32>,
    return
  }
  func.func @transform_0(%arg0: i32) -> (i32, i32) {
    %c0_i32 = arith.constant 0 : i32
    %c0_i32_0 = arith.constant 0 : i32
    return %arg0, %c0_i32 : i32, i32
  }
  func.func @transform_1(%arg0: i32) -> (i32, i32) {
    %c0_i32 = arith.constant 0 : i32
    %c0_i32_0 = arith.constant 0 : i32
    %c0_i32_1 = arith.constant 0 : i32
    return %c0_i32, %c0_i32_0 : i32, i32
  }
  func.func @transform_2(%arg0: i32) -> (i32, i32) {
    %c0_i32 = arith.constant 0 : i32
    %c0_i32_0 = arith.constant 0 : i32
    %c0_i32_1 = arith.constant 0 : i32
    return %c0_i32, %c0_i32_0 : i32, i32
  }
  func.func @transform_3(%arg0: i32) -> (i32, i32) {
    %c0_i32 = arith.constant 0 : i32
    %c0_i32_0 = arith.constant 0 : i32
    return %arg0, %c0_i32 : i32, i32
  }
}

module attributes {stable_mosaic.version = 11 : i64} {
  func.func @_layernorm_rowwise_kernel(%arg0: i32, %arg1: memref<16x32xf32, #tpu.memory_space<vmem>>, %arg2: memref<1x32xf32, #tpu.memory_space<vmem>>, %arg3: memref<1x32xf32, #tpu.memory_space<vmem>>, %arg4: memref<16x32xf32, #tpu.memory_space<vmem>>) attributes {dimension_semantics = [#tpu.dimension_semantics<parallel>], iteration_bounds = array<i64: 1>, scalar_prefetch = 0 : i64, scratch_operands = 0 : i64, tpu.core_type = #tpu.core_type<tc>, window_params = [{transform_indices = @transform_0, window_bounds = array<i64: 16, 32>}, {pipeline_mode = #tpu.pipeline_mode<synchronous>, transform_indices = @transform_1, window_bounds = array<i64: 1, 32>}, {pipeline_mode = #tpu.pipeline_mode<synchronous>, transform_indices = @transform_2, window_bounds = array<i64: 1, 32>}, {transform_indices = @transform_3, window_bounds = array<i64: 16, 32>}]} {
    %c0 = arith.constant 0 : index
    %c0_0 = arith.constant 0 : index
    %0 = vector.load %arg1[%c0, %c0_0] : memref<16x32xf32, #tpu.memory_space<vmem>>, vector<16x32xf32>
    %cst = arith.constant dense<0.000000e+00> : vector<16xf32>
    %1 = vector.multi_reduction <add>, %0, %cst [1] : vector<16x32xf32> to vector<16xf32>
    %2 = vector.shape_cast %1 : vector<16xf32> to vector<16x1xf32>
    %cst_1 = arith.constant 3.125000e-02 : f32
    %3 = vector.broadcast %cst_1 : f32 to vector<16x1xf32>
    %4 = arith.mulf %2, %3 : vector<16x1xf32>
    %5 = vector.broadcast %4 : vector<16x1xf32> to vector<16x32xf32>
    %6 = arith.subf %0, %5 : vector<16x32xf32>
    %7 = arith.mulf %6, %6 : vector<16x32xf32>
    %cst_2 = arith.constant dense<0.000000e+00> : vector<16xf32>
    %8 = vector.multi_reduction <add>, %7, %cst_2 [1] : vector<16x32xf32> to vector<16xf32>
    %9 = vector.shape_cast %8 : vector<16xf32> to vector<16x1xf32>
    %cst_3 = arith.constant 3.125000e-02 : f32
    %10 = vector.broadcast %cst_3 : f32 to vector<16x1xf32>
    %11 = arith.mulf %9, %10 : vector<16x1xf32>
    %cst_4 = arith.constant 9.99999996E-13 : f32
    %12 = vector.broadcast %cst_4 : f32 to vector<16x1xf32>
    %13 = arith.addf %11, %12 : vector<16x1xf32>
    %14 = math.rsqrt %13 : vector<16x1xf32>
    %c0_5 = arith.constant 0 : index
    %c0_6 = arith.constant 0 : index
    %15 = vector.load %arg2[%c0_5, %c0_6] : memref<1x32xf32, #tpu.memory_space<vmem>>, vector<1x32xf32>
    %16 = vector.broadcast %14 : vector<16x1xf32> to vector<16x32xf32>
    %17 = arith.mulf %6, %16 : vector<16x32xf32>
    %18 = vector.broadcast %15 : vector<1x32xf32> to vector<16x32xf32>
    %19 = arith.mulf %18, %17 : vector<16x32xf32>
    %c0_7 = arith.constant 0 : index
    %c0_8 = arith.constant 0 : index
    %20 = vector.load %arg3[%c0_7, %c0_8] : memref<1x32xf32, #tpu.memory_space<vmem>>, vector<1x32xf32>
    %21 = vector.broadcast %20 : vector<1x32xf32> to vector<16x32xf32>
    %22 = arith.addf %19, %21 : vector<16x32xf32>
    %c0_9 = arith.constant 0 : index
    %c0_10 = arith.constant 0 : index
    %23 = vector.load %arg4[%c0_9, %c0_10] : memref<16x32xf32, #tpu.memory_space<vmem>>, vector<16x32xf32>
    tpu.vector_store %arg4[%c0_9, %c0_10], %22 {strides = array<i32>} : memref<16x32xf32, #tpu.memory_space<vmem>>, vector<16x32xf32>,
    return
  }
  func.func @transform_0(%arg0: i32) -> (i32, i32) {
    %c0_i32 = arith.constant 0 : i32
    %c0_i32_0 = arith.constant 0 : i32
    return %arg0, %c0_i32 : i32, i32
  }
  func.func @transform_1(%arg0: i32) -> (i32, i32) {
    %c0_i32 = arith.constant 0 : i32
    %c0_i32_0 = arith.constant 0 : i32
    %c0_i32_1 = arith.constant 0 : i32
    return %c0_i32, %c0_i32_0 : i32, i32
  }
  func.func @transform_2(%arg0: i32) -> (i32, i32) {
    %c0_i32 = arith.constant 0 : i32
    %c0_i32_0 = arith.constant 0 : i32
    %c0_i32_1 = arith.constant 0 : i32
    return %c0_i32, %c0_i32_0 : i32, i32
  }
  func.func @transform_3(%arg0: i32) -> (i32, i32) {
    %c0_i32 = arith.constant 0 : i32
    %c0_i32_0 = arith.constant 0 : i32
    return %arg0, %c0_i32 : i32, i32
  }
}

</mosaic_0001>

<llo_original>
// kernel: tpu_custom_call.1
$region0: #{tpu_custom_call.1}
  #allocation0 [shape = 'u32[]', space=smem, size = 0x4, offset = 0x4, fixed_abs, tag = 'smem constant byte address 0x4 - core index']
  #allocation1 [shape = 'u32[72,128]{1,0:T(1,128)}', space=vmem, size = 0x9000, scoped, tag = 'internal scratch']
  %s0 = inlined_call_operand.hbm [shape: f32[4,128], index: 0, kind: input, shape index: {}]
  %s1 = inlined_call_operand.hbm [shape: f32[1,128], index: 1, kind: input, shape index: {}]
  %s2 = inlined_call_operand.vmem [shape: f32[1,128], index: 2, kind: input, shape index: {}]
  %s3 = inlined_call_operand.hbm [shape: f32[128,128], index: 3, kind: input, shape index: {}]
  %s4 = inlined_call_operand.hbm [shape: f32[4,128], index: 4, kind: output, shape index: {}]
  %s5 = sld [smem:[#allocation0]]
  $region38: #{tpu_custom_call.1} parent=0
    _
  %s7 = ssub.s32 1, %s5
  %s8 = scalar_select 0, %s7, %s5
  $region1: #{tpu_custom_call.1} parent=0
    #allocation2 [shape = 'u8[2048]{0}', space=vmem, size = 0x800, scoped, tag = 'input window, operand 0, single buffered']
    #allocation3 [shape = 's32[1]{0}', space=sflag, size = 0x4, scoped, tag = 'scoped memory for tpu_custom_call.1']
    #allocation4 [shape = 's32[1]{0}', space=sflag, size = 0x4, scoped, tag = 'scoped memory for tpu_custom_call.1']
    #allocation5 [shape = 'u8[512]{0}', space=vmem, size = 0x400, scoped, tag = 'input window, operand 1, single buffered']
    #allocation6 [shape = 's32[1]{0}', space=sflag, size = 0x4, scoped, tag = 'scoped memory for tpu_custom_call.1']
    #allocation7 [shape = 'u8[65536]{0}', space=vmem, size = 0x10000, scoped, tag = 'input window, operand 3, single buffered']
    #allocation8 [shape = 'u8[2048]{0}', space=vmem, size = 0x800, scoped, tag = 'output window, operand 0, single buffered']
    %9 = vsyncpa [#allocation3], 0
    %10 = vsyncpa [#allocation6], 0
    %11 = vsyncpa [#allocation4], 0
    // Predicated region
    $region2: #{tpu_custom_call.1} parent=1 // pred_check
      _
    $region3: #{tpu_custom_call.1} parent=1 // pred_check_branch
      %13 = sbr.rel (0) target = $region5
    $region4: #{tpu_custom_call.1} parent=1 // pred_region
      %15 = vsyncadd [#allocation3], 0
      %s16 = smul.addr %s8, 4
      %s17 = scalar_lea.hbm %s0, %s16
      %s19 = sshll.u32 %s17, 4
      %s20 = int_to_ptr.hbm [resolvable:$true] %s19
      %s21 = sshll.u32 [#allocation2], 4
      %s22 = int_to_ptr.vmem [resolvable:$true] %s21
      %24 = dma.hbm_to_vmem [thread:$0]  %s20, 64, %s22, [#allocation3]
    $region5: #{tpu_custom_call.1} parent=1 // pred_fallthru
      _
    // Predicated region
    $region6: #{tpu_custom_call.1} parent=1 // pred_check
      _
    $region7: #{tpu_custom_call.1} parent=1 // pred_check_branch
      %26 = sbr.rel (0) target = $region9
    $region8: #{tpu_custom_call.1} parent=1 // pred_region
      %28 = vsyncadd [#allocation6], 0
      %s30 = sshll.u32 %s1, 4
      %s31 = int_to_ptr.hbm [resolvable:$true] %s30
      %s32 = sshll.u32 [#allocation5], 4
      %s33 = int_to_ptr.vmem [resolvable:$true] %s32
      %35 = dma.hbm_to_vmem [thread:$0]  %s31, 16, %s33, [#allocation6]
    $region9: #{tpu_custom_call.1} parent=1 // pred_fallthru
      _
    // Predicated region
    $region10: #{tpu_custom_call.1} parent=1 // pred_check
      _
    $region11: #{tpu_custom_call.1} parent=1 // pred_check_branch
      %37 = sbr.rel (0) target = $region13
    $region12: #{tpu_custom_call.1} parent=1 // pred_region
      _
    $region13: #{tpu_custom_call.1} parent=1 // pred_fallthru
      _
    // Predicated region
    $region14: #{tpu_custom_call.1} parent=1 // pred_check
      _
    $region15: #{tpu_custom_call.1} parent=1 // pred_check_branch
      %39 = sbr.rel (0) target = $region17
    $region16: #{tpu_custom_call.1} parent=1 // pred_region
      %41 = vsyncadd [#allocation6], 0
      %s42 = sshll.u32 %s3, 4
      %s43 = int_to_ptr.hbm [resolvable:$true] %s42
      %s44 = sshll.u32 [#allocation7], 4
      %s45 = int_to_ptr.vmem [resolvable:$true] %s44
      %50 = dma.hbm_to_vmem [thread:$0]  %s43, 2048, %s45, [#allocation6], 128, 128, 8
    $region17: #{tpu_custom_call.1} parent=1 // pred_fallthru
      _
    // Predicated region
    $region18: #{tpu_custom_call.1} parent=1 // pred_check
      _
    $region19: #{tpu_custom_call.1} parent=1 // pred_check_branch
      %52 = sbr.rel (0) target = $region21
    $region20: #{tpu_custom_call.1} parent=1 // pred_region
      %54 = dma.done [#allocation3], 64
    $region21: #{tpu_custom_call.1} parent=1 // pred_fallthru
      _
    // Predicated region
    $region22: #{tpu_custom_call.1} parent=1 // pred_check
      _
    $region23: #{tpu_custom_call.1} parent=1 // pred_check_branch
      %56 = sbr.rel (0) target = $region25
    $region24: #{tpu_custom_call.1} parent=1 // pred_region
      %58 = dma.done [#allocation6], 16
    $region25: #{tpu_custom_call.1} parent=1 // pred_fallthru
      _
    // Predicated region
    $region26: #{tpu_custom_call.1} parent=1 // pred_check
      _
    $region27: #{tpu_custom_call.1} parent=1 // pred_check_branch
      %60 = sbr.rel (0) target = $region29
    $region28: #{tpu_custom_call.1} parent=1 // pred_region
      %62 = dma.done [#allocation6], 2048
    $region29: #{tpu_custom_call.1} parent=1 // pred_fallthru
      _
    %v63 = vld [vmem:[#allocation2] sm:$0xf]
    %v64 = vld [vmem:[#allocation7] sm:$0xff]
    %v65 = vld [vmem:[#allocation7 + $0x8] sm:$0xff]
    %v66 = vld [vmem:[#allocation7 + $0x10] sm:$0xff]
    %v67 = vld [vmem:[#allocation7 + $0x18] sm:$0xff]
    %v68 = vld [vmem:[#allocation7 + $0x20] sm:$0xff]
    %v69 = vld [vmem:[#allocation7 + $0x28] sm:$0xff]
    %v70 = vld [vmem:[#allocation7 + $0x30] sm:$0xff]
    %v71 = vld [vmem:[#allocation7 + $0x38] sm:$0xff]
    %v72 = vld [vmem:[#allocation7 + $0x40] sm:$0xff]
    %v73 = vld [vmem:[#allocation7 + $0x48] sm:$0xff]
    %v74 = vld [vmem:[#allocation7 + $0x50] sm:$0xff]
    %v75 = vld [vmem:[#allocation7 + $0x58] sm:$0xff]
    %v76 = vld [vmem:[#allocation7 + $0x60] sm:$0xff]
    %v77 = vld [vmem:[#allocation7 + $0x68] sm:$0xff]
    %v78 = vld [vmem:[#allocation7 + $0x70] sm:$0xff]
    %v79 = vld [vmem:[#allocation7 + $0x78] sm:$0xff]
    %v80 = vand.u32 %v79, 4294901760
    %81 = vmatpush.msra.mxu0 %v80
    %v82 = vand.u32 %v78, 4294901760
    %83 = vmatpush.msra.mxu0 %v82
    %v84 = vand.u32 %v77, 4294901760
    %85 = vmatpush.msra.mxu0 %v84
    %v86 = vand.u32 %v76, 4294901760
    %87 = vmatpush.msra.mxu0 %v86
    %v88 = vand.u32 %v75, 4294901760
    %89 = vmatpush.msra.mxu0 %v88
    %v90 = vand.u32 %v74, 4294901760
    %91 = vmatpush.msra.mxu0 %v90
    %v92 = vand.u32 %v73, 4294901760
    %93 = vmatpush.msra.mxu0 %v92
    %v94 = vand.u32 %v72, 4294901760
    %95 = vmatpush.msra.mxu0 %v94
    %v96 = vand.u32 %v71, 4294901760
    %97 = vmatpush.msra.mxu0 %v96
    %v98 = vand.u32 %v70, 4294901760
    %99 = vmatpush.msra.mxu0 %v98
    %v100 = vand.u32 %v69, 4294901760
    %101 = vmatpush.msra.mxu0 %v100
    %v102 = vand.u32 %v68, 4294901760
    %103 = vmatpush.msra.mxu0 %v102
    %v104 = vand.u32 %v67, 4294901760
    %105 = vmatpush.msra.mxu0 %v104
    %v106 = vand.u32 %v66, 4294901760
    %107 = vmatpush.msra.mxu0 %v106
    %v108 = vand.u32 %v65, 4294901760
    %109 = vmatpush.msra.mxu0 %v108
    %v110 = vand.u32 %v64, 4294901760
    %111 = vmatpush.msra.mxu0 %v110
    %v112 = vand.u32 %v63, 4294901760
    %v113 = vsub.f32 %v63, %v112
    %v114 = vand.u32 %v113, 4294901760
    %v115 = vsub.f32 %v113, %v114
    %v116 = vand.u32 %v115, 4294901760
    %117 = vmatmul.f32.gmra.mxu0 %v116
    %v118 = vpop.f32.mrf.mxu0
    %v119 = vadd.f32 0.0, %v118
    %120 = vdwg.mxu0
    %v121 = vand.u32 %v79, 4294901760
    %v122 = vsub.f32 %v79, %v121
    %v123 = vand.u32 %v122, 4294901760
    %v124 = vsub.f32 %v122, %v123
    %v125 = vand.u32 %v124, 4294901760
    %126 = vmatpush.msra.mxu0 %v125
    %v127 = vand.u32 %v78, 4294901760
    %v128 = vsub.f32 %v78, %v127
    %v129 = vand.u32 %v128, 4294901760
    %v130 = vsub.f32 %v128, %v129
    %v131 = vand.u32 %v130, 4294901760
    %132 = vmatpush.msra.mxu0 %v131
    %v133 = vand.u32 %v77, 4294901760
    %v134 = vsub.f32 %v77, %v133
    %v135 = vand.u32 %v134, 4294901760
    %v136 = vsub.f32 %v134, %v135
    %v137 = vand.u32 %v136, 4294901760
    %138 = vmatpush.msra.mxu0 %v137
    %v139 = vand.u32 %v76, 4294901760
    %v140 = vsub.f32 %v76, %v139
    %v141 = vand.u32 %v140, 4294901760
    %v142 = vsub.f32 %v140, %v141
    %v143 = vand.u32 %v142, 4294901760
    %144 = vmatpush.msra.mxu0 %v143
    %v145 = vand.u32 %v75, 4294901760
    %v146 = vsub.f32 %v75, %v145
    %v147 = vand.u32 %v146, 4294901760
    %v148 = vsub.f32 %v146, %v147
    %v149 = vand.u32 %v148, 4294901760
    %150 = vmatpush.msra.mxu0 %v149
    %v151 = vand.u32 %v74, 4294901760
    %v152 = vsub.f32 %v74, %v151
    %v153 = vand.u32 %v152, 4294901760
    %v154 = vsub.f32 %v152, %v153
    %v155 = vand.u32 %v154, 4294901760
    %156 = vmatpush.msra.mxu0 %v155
    %v157 = vand.u32 %v73, 4294901760
    %v158 = vsub.f32 %v73, %v157
    %v159 = vand.u32 %v158, 4294901760
    %v160 = vsub.f32 %v158, %v159
    %v161 = vand.u32 %v160, 4294901760
    %162 = vmatpush.msra.mxu0 %v161
    %v163 = vand.u32 %v72, 4294901760
    %v164 = vsub.f32 %v72, %v163
    %v165 = vand.u32 %v164, 4294901760
    %v166 = vsub.f32 %v164, %v165
    %v167 = vand.u32 %v166, 4294901760
    %168 = vmatpush.msra.mxu0 %v167
    %v169 = vand.u32 %v71, 4294901760
    %v170 = vsub.f32 %v71, %v169
    %v171 = vand.u32 %v170, 4294901760
    %v172 = vsub.f32 %v170, %v171
    %v173 = vand.u32 %v172, 4294901760
    %174 = vmatpush.msra.mxu0 %v173
    %v175 = vand.u32 %v70, 4294901760
    %v176 = vsub.f32 %v70, %v175
    %v177 = vand.u32 %v176, 4294901760
    %v178 = vsub.f32 %v176, %v177
    %v179 = vand.u32 %v178, 4294901760
    %180 = vmatpush.msra.mxu0 %v179
    %v181 = vand.u32 %v69, 4294901760
    %v182 = vsub.f32 %v69, %v181
    %v183 = vand.u32 %v182, 4294901760
    %v184 = vsub.f32 %v182, %v183
    %v185 = vand.u32 %v184, 4294901760
    %186 = vmatpush.msra.mxu0 %v185
    %v187 = vand.u32 %v68, 4294901760
    %v188 = vsub.f32 %v68, %v187
    %v189 = vand.u32 %v188, 4294901760
    %v190 = vsub.f32 %v188, %v189
    %v191 = vand.u32 %v190, 4294901760
    %192 = vmatpush.msra.mxu0 %v191
    %v193 = vand.u32 %v67, 4294901760
    %v194 = vsub.f32 %v67, %v193
    %v195 = vand.u32 %v194, 4294901760
    %v196 = vsub.f32 %v194, %v195
    %v197 = vand.u32 %v196, 4294901760
    %198 = vmatpush.msra.mxu0 %v197
    %v199 = vand.u32 %v66, 4294901760
    %v200 = vsub.f32 %v66, %v199
    %v201 = vand.u32 %v200, 4294901760
    %v202 = vsub.f32 %v200, %v201
    %v203 = vand.u32 %v202, 4294901760
    %204 = vmatpush.msra.mxu0 %v203
    %v205 = vand.u32 %v65, 4294901760
    %v206 = vsub.f32 %v65, %v205
    %v207 = vand.u32 %v206, 4294901760
    %v208 = vsub.f32 %v206, %v207
    %v209 = vand.u32 %v208, 4294901760
    %210 = vmatpush.msra.mxu0 %v209
    %v211 = vand.u32 %v64, 4294901760
    %v212 = vsub.f32 %v64, %v211
    %v213 = vand.u32 %v212, 4294901760
    %v214 = vsub.f32 %v212, %v213
    %v215 = vand.u32 %v214, 4294901760
    %216 = vmatpush.msra.mxu0 %v215
    %v217 = vand.u32 %v63, 4294901760
    %218 = vmatmul.f32.gmra.mxu0 %v217
    %v219 = vpop.f32.mrf.mxu0
    %v220 = vadd.f32 %v119, %v219
    %221 = vdwg.mxu0
    %v222 = vand.u32 %v79, 4294901760
    %v223 = vsub.f32 %v79, %v222
    %224 = vmatpush.msra.mxu0 %v223
    %v225 = vand.u32 %v78, 4294901760
    %v226 = vsub.f32 %v78, %v225
    %227 = vmatpush.msra.mxu0 %v226
    %v228 = vand.u32 %v77, 4294901760
    %v229 = vsub.f32 %v77, %v228
    %230 = vmatpush.msra.mxu0 %v229
    %v231 = vand.u32 %v76, 4294901760
    %v232 = vsub.f32 %v76, %v231
    %233 = vmatpush.msra.mxu0 %v232
    %v234 = vand.u32 %v75, 4294901760
    %v235 = vsub.f32 %v75, %v234
    %236 = vmatpush.msra.mxu0 %v235
    %v237 = vand.u32 %v74, 4294901760
    %v238 = vsub.f32 %v74, %v237
    %239 = vmatpush.msra.mxu0 %v238
    %v240 = vand.u32 %v73, 4294901760
    %v241 = vsub.f32 %v73, %v240
    %242 = vmatpush.msra.mxu0 %v241
    %v243 = vand.u32 %v72, 4294901760
    %v244 = vsub.f32 %v72, %v243
    %245 = vmatpush.msra.mxu0 %v244
    %v246 = vand.u32 %v71, 4294901760
    %v247 = vsub.f32 %v71, %v246
    %248 = vmatpush.msra.mxu0 %v247
    %v249 = vand.u32 %v70, 4294901760
    %v250 = vsub.f32 %v70, %v249
    %251 = vmatpush.msra.mxu0 %v250
    %v252 = vand.u32 %v69, 4294901760
    %v253 = vsub.f32 %v69, %v252
    %254 = vmatpush.msra.mxu0 %v253
    %v255 = vand.u32 %v68, 4294901760
    %v256 = vsub.f32 %v68, %v255
    %257 = vmatpush.msra.mxu0 %v256
    %v258 = vand.u32 %v67, 4294901760
    %v259 = vsub.f32 %v67, %v258
    %260 = vmatpush.msra.mxu0 %v259
    %v261 = vand.u32 %v66, 4294901760
    %v262 = vsub.f32 %v66, %v261
    %263 = vmatpush.msra.mxu0 %v262
    %v264 = vand.u32 %v65, 4294901760
    %v265 = vsub.f32 %v65, %v264
    %266 = vmatpush.msra.mxu0 %v265
    %v267 = vand.u32 %v64, 4294901760
    %v268 = vsub.f32 %v64, %v267
    %269 = vmatpush.msra.mxu0 %v268
    %v270 = vand.u32 %v63, 4294901760
    %v271 = vsub.f32 %v63, %v270
    %272 = vmatmul.f32.gmra.mxu0 %v271
    %v273 = vpop.f32.mrf.mxu0
    %v274 = vadd.f32 %v220, %v273
    %275 = vdwg.mxu0
    %v276 = vand.u32 %v79, 4294901760
    %277 = vmatpush.msra.mxu0 %v276
    %v278 = vand.u32 %v78, 4294901760
    %279 = vmatpush.msra.mxu0 %v278
    %v280 = vand.u32 %v77, 4294901760
    %281 = vmatpush.msra.mxu0 %v280
    %v282 = vand.u32 %v76, 4294901760
    %283 = vmatpush.msra.mxu0 %v282
    %v284 = vand.u32 %v75, 4294901760
    %285 = vmatpush.msra.mxu0 %v284
    %v286 = vand.u32 %v74, 4294901760
    %287 = vmatpush.msra.mxu0 %v286
    %v288 = vand.u32 %v73, 4294901760
    %289 = vmatpush.msra.mxu0 %v288
    %v290 = vand.u32 %v72, 4294901760
    %291 = vmatpush.msra.mxu0 %v290
    %v292 = vand.u32 %v71, 4294901760
    %293 = vmatpush.msra.mxu0 %v292
    %v294 = vand.u32 %v70, 4294901760
    %295 = vmatpush.msra.mxu0 %v294
    %v296 = vand.u32 %v69, 4294901760
    %297 = vmatpush.msra.mxu0 %v296
    %v298 = vand.u32 %v68, 4294901760
    %299 = vmatpush.msra.mxu0 %v298
    %v300 = vand.u32 %v67, 4294901760
    %301 = vmatpush.msra.mxu0 %v300
    %v302 = vand.u32 %v66, 4294901760
    %303 = vmatpush.msra.mxu0 %v302
    %v304 = vand.u32 %v65, 4294901760
    %305 = vmatpush.msra.mxu0 %v304
    %v306 = vand.u32 %v64, 4294901760
    %307 = vmatpush.msra.mxu0 %v306
    %v308 = vand.u32 %v63, 4294901760
    %v309 = vsub.f32 %v63, %v308
    %v310 = vand.u32 %v309, 4294901760
    %311 = vmatmul.f32.gmra.mxu0 %v310
    %v312 = vpop.f32.mrf.mxu0
    %v313 = vadd.f32 %v274, %v312
    %314 = vdwg.mxu0
    %v315 = vand.u32 %v79, 4294901760
    %v316 = vsub.f32 %v79, %v315
    %v317 = vand.u32 %v316, 4294901760
    %318 = vmatpush.msra.mxu0 %v317
    %v319 = vand.u32 %v78, 4294901760
    %v320 = vsub.f32 %v78, %v319
    %v321 = vand.u32 %v320, 4294901760
    %322 = vmatpush.msra.mxu0 %v321
    %v323 = vand.u32 %v77, 4294901760
    %v324 = vsub.f32 %v77, %v323
    %v325 = vand.u32 %v324, 4294901760
    %326 = vmatpush.msra.mxu0 %v325
    %v327 = vand.u32 %v76, 4294901760
    %v328 = vsub.f32 %v76, %v327
    %v329 = vand.u32 %v328, 4294901760
    %330 = vmatpush.msra.mxu0 %v329
    %v331 = vand.u32 %v75, 4294901760
    %v332 = vsub.f32 %v75, %v331
    %v333 = vand.u32 %v332, 4294901760
    %334 = vmatpush.msra.mxu0 %v333
    %v335 = vand.u32 %v74, 4294901760
    %v336 = vsub.f32 %v74, %v335
    %v337 = vand.u32 %v336, 4294901760
    %338 = vmatpush.msra.mxu0 %v337
    %v339 = vand.u32 %v73, 4294901760
    %v340 = vsub.f32 %v73, %v339
    %v341 = vand.u32 %v340, 4294901760
    %342 = vmatpush.msra.mxu0 %v341
    %v343 = vand.u32 %v72, 4294901760
    %v344 = vsub.f32 %v72, %v343
    %v345 = vand.u32 %v344, 4294901760
    %346 = vmatpush.msra.mxu0 %v345
    %v347 = vand.u32 %v71, 4294901760
    %v348 = vsub.f32 %v71, %v347
    %v349 = vand.u32 %v348, 4294901760
    %350 = vmatpush.msra.mxu0 %v349
    %v351 = vand.u32 %v70, 4294901760
    %v352 = vsub.f32 %v70, %v351
    %v353 = vand.u32 %v352, 4294901760
    %354 = vmatpush.msra.mxu0 %v353
    %v355 = vand.u32 %v69, 4294901760
    %v356 = vsub.f32 %v69, %v355
    %v357 = vand.u32 %v356, 4294901760
    %358 = vmatpush.msra.mxu0 %v357
    %v359 = vand.u32 %v68, 4294901760
    %v360 = vsub.f32 %v68, %v359
    %v361 = vand.u32 %v360, 4294901760
    %362 = vmatpush.msra.mxu0 %v361
    %v363 = vand.u32 %v67, 4294901760
    %v364 = vsub.f32 %v67, %v363
    %v365 = vand.u32 %v364, 4294901760
    %366 = vmatpush.msra.mxu0 %v365
    %v367 = vand.u32 %v66, 4294901760
    %v368 = vsub.f32 %v66, %v367
    %v369 = vand.u32 %v368, 4294901760
    %370 = vmatpush.msra.mxu0 %v369
    %v371 = vand.u32 %v65, 4294901760
    %v372 = vsub.f32 %v65, %v371
    %v373 = vand.u32 %v372, 4294901760
    %374 = vmatpush.msra.mxu0 %v373
    %v375 = vand.u32 %v64, 4294901760
    %v376 = vsub.f32 %v64, %v375
    %v377 = vand.u32 %v376, 4294901760
    %378 = vmatpush.msra.mxu0 %v377
    %v379 = vand.u32 %v63, 4294901760
    %380 = vmatmul.f32.gmra.mxu0 %v379
    %v381 = vpop.f32.mrf.mxu0
    %v382 = vadd.f32 %v313, %v381
    %383 = vdwg.mxu0
    %v384 = vand.u32 %v79, 4294901760
    %385 = vmatpush.msra.mxu0 %v384
    %v386 = vand.u32 %v78, 4294901760
    %387 = vmatpush.msra.mxu0 %v386
    %v388 = vand.u32 %v77, 4294901760
    %389 = vmatpush.msra.mxu0 %v388
    %v390 = vand.u32 %v76, 4294901760
    %391 = vmatpush.msra.mxu0 %v390
    %v392 = vand.u32 %v75, 4294901760
    %393 = vmatpush.msra.mxu0 %v392
    %v394 = vand.u32 %v74, 4294901760
    %395 = vmatpush.msra.mxu0 %v394
    %v396 = vand.u32 %v73, 4294901760
    %397 = vmatpush.msra.mxu0 %v396
    %v398 = vand.u32 %v72, 4294901760
    %399 = vmatpush.msra.mxu0 %v398
    %v400 = vand.u32 %v71, 4294901760
    %401 = vmatpush.msra.mxu0 %v400
    %v402 = vand.u32 %v70, 4294901760
    %403 = vmatpush.msra.mxu0 %v402
    %v404 = vand.u32 %v69, 4294901760
    %405 = vmatpush.msra.mxu0 %v404
    %v406 = vand.u32 %v68, 4294901760
    %407 = vmatpush.msra.mxu0 %v406
    %v408 = vand.u32 %v67, 4294901760
    %409 = vmatpush.msra.mxu0 %v408
    %v410 = vand.u32 %v66, 4294901760
    %411 = vmatpush.msra.mxu0 %v410
    %v412 = vand.u32 %v65, 4294901760
    %413 = vmatpush.msra.mxu0 %v412
    %v414 = vand.u32 %v64, 4294901760
    %415 = vmatpush.msra.mxu0 %v414
    %v416 = vand.u32 %v63, 4294901760
    %417 = vmatmul.f32.gmra.mxu0 %v416
    %v418 = vpop.f32.mrf.mxu0
    %v419 = vadd.f32 %v382, %v418
    %420 = vdwg.mxu0
    %v421 = vmul.f32 %v419, 0.03125
    %v422 = vsub.f32 %v63, %v421
    %v423 = vmul.f32 %v422, %v422
    %v424 = vand.u32 %v79, 4294901760
    %425 = vmatpush.msra.mxu0 %v424
    %v426 = vand.u32 %v78, 4294901760
    %427 = vmatpush.msra.mxu0 %v426
    %v428 = vand.u32 %v77, 4294901760
    %429 = vmatpush.msra.mxu0 %v428
    %v430 = vand.u32 %v76, 4294901760
    %431 = vmatpush.msra.mxu0 %v430
    %v432 = vand.u32 %v75, 4294901760
    %433 = vmatpush.msra.mxu0 %v432
    %v434 = vand.u32 %v74, 4294901760
    %435 = vmatpush.msra.mxu0 %v434
    %v436 = vand.u32 %v73, 4294901760
    %437 = vmatpush.msra.mxu0 %v436
    %v438 = vand.u32 %v72, 4294901760
    %439 = vmatpush.msra.mxu0 %v438
    %v440 = vand.u32 %v71, 4294901760
    %441 = vmatpush.msra.mxu0 %v440
    %v442 = vand.u32 %v70, 4294901760
    %443 = vmatpush.msra.mxu0 %v442
    %v444 = vand.u32 %v69, 4294901760
    %445 = vmatpush.msra.mxu0 %v444
    %v446 = vand.u32 %v68, 4294901760
    %447 = vmatpush.msra.mxu0 %v446
    %v448 = vand.u32 %v67, 4294901760
    %449 = vmatpush.msra.mxu0 %v448
    %v450 = vand.u32 %v66, 4294901760
    %451 = vmatpush.msra.mxu0 %v450
    %v452 = vand.u32 %v65, 4294901760
    %453 = vmatpush.msra.mxu0 %v452
    %v454 = vand.u32 %v64, 4294901760
    %455 = vmatpush.msra.mxu0 %v454
    %v456 = vand.u32 %v423, 4294901760
    %v457 = vsub.f32 %v423, %v456
    %v458 = vand.u32 %v457, 4294901760
    %v459 = vsub.f32 %v457, %v458
    %v460 = vand.u32 %v459, 4294901760
    %461 = vmatmul.f32.gmra.mxu0 %v460
    %v462 = vpop.f32.mrf.mxu0
    %v463 = vadd.f32 0.0, %v462
    %464 = vdwg.mxu0
    %v465 = vand.u32 %v79, 4294901760
    %v466 = vsub.f32 %v79, %v465
    %v467 = vand.u32 %v466, 4294901760
    %v468 = vsub.f32 %v466, %v467
    %v469 = vand.u32 %v468, 4294901760
    %470 = vmatpush.msra.mxu0 %v469
    %v471 = vand.u32 %v78, 4294901760
    %v472 = vsub.f32 %v78, %v471
    %v473 = vand.u32 %v472, 4294901760
    %v474 = vsub.f32 %v472, %v473
    %v475 = vand.u32 %v474, 4294901760
    %476 = vmatpush.msra.mxu0 %v475
    %v477 = vand.u32 %v77, 4294901760
    %v478 = vsub.f32 %v77, %v477
    %v479 = vand.u32 %v478, 4294901760
    %v480 = vsub.f32 %v478, %v479
    %v481 = vand.u32 %v480, 4294901760
    %482 = vmatpush.msra.mxu0 %v481
    %v483 = vand.u32 %v76, 4294901760
    %v484 = vsub.f32 %v76, %v483
    %v485 = vand.u32 %v484, 4294901760
    %v486 = vsub.f32 %v484, %v485
    %v487 = vand.u32 %v486, 4294901760
    %488 = vmatpush.msra.mxu0 %v487
    %v489 = vand.u32 %v75, 4294901760
    %v490 = vsub.f32 %v75, %v489
    %v491 = vand.u32 %v490, 4294901760
    %v492 = vsub.f32 %v490, %v491
    %v493 = vand.u32 %v492, 4294901760
    %494 = vmatpush.msra.mxu0 %v493
    %v495 = vand.u32 %v74, 4294901760
    %v496 = vsub.f32 %v74, %v495
    %v497 = vand.u32 %v496, 4294901760
    %v498 = vsub.f32 %v496, %v497
    %v499 = vand.u32 %v498, 4294901760
    %500 = vmatpush.msra.mxu0 %v499
    %v501 = vand.u32 %v73, 4294901760
    %v502 = vsub.f32 %v73, %v501
    %v503 = vand.u32 %v502, 4294901760
    %v504 = vsub.f32 %v502, %v503
    %v505 = vand.u32 %v504, 4294901760
    %506 = vmatpush.msra.mxu0 %v505
    %v507 = vand.u32 %v72, 4294901760
    %v508 = vsub.f32 %v72, %v507
    %v509 = vand.u32 %v508, 4294901760
    %v510 = vsub.f32 %v508, %v509
    %v511 = vand.u32 %v510, 4294901760
    %512 = vmatpush.msra.mxu0 %v511
    %v513 = vand.u32 %v71, 4294901760
    %v514 = vsub.f32 %v71, %v513
    %v515 = vand.u32 %v514, 4294901760
    %v516 = vsub.f32 %v514, %v515
    %v517 = vand.u32 %v516, 4294901760
    %518 = vmatpush.msra.mxu0 %v517
    %v519 = vand.u32 %v70, 4294901760
    %v520 = vsub.f32 %v70, %v519
    %v521 = vand.u32 %v520, 4294901760
    %v522 = vsub.f32 %v520, %v521
    %v523 = vand.u32 %v522, 4294901760
    %524 = vmatpush.msra.mxu0 %v523
    %v525 = vand.u32 %v69, 4294901760
    %v526 = vsub.f32 %v69, %v525
    %v527 = vand.u32 %v526, 4294901760
    %v528 = vsub.f32 %v526, %v527
    %v529 = vand.u32 %v528, 4294901760
    %530 = vmatpush.msra.mxu0 %v529
    %v531 = vand.u32 %v68, 4294901760
    %v532 = vsub.f32 %v68, %v531
    %v533 = vand.u32 %v532, 4294901760
    %v534 = vsub.f32 %v532, %v533
    %v535 = vand.u32 %v534, 4294901760
    %536 = vmatpush.msra.mxu0 %v535
    %v537 = vand.u32 %v67, 4294901760
    %v538 = vsub.f32 %v67, %v537
    %v539 = vand.u32 %v538, 4294901760
    %v540 = vsub.f32 %v538, %v539
    %v541 = vand.u32 %v540, 4294901760
    %542 = vmatpush.msra.mxu0 %v541
    %v543 = vand.u32 %v66, 4294901760
    %v544 = vsub.f32 %v66, %v543
    %v545 = vand.u32 %v544, 4294901760
    %v546 = vsub.f32 %v544, %v545
    %v547 = vand.u32 %v546, 4294901760
    %548 = vmatpush.msra.mxu0 %v547
    %v549 = vand.u32 %v65, 4294901760
    %v550 = vsub.f32 %v65, %v549
    %v551 = vand.u32 %v550, 4294901760
    %v552 = vsub.f32 %v550, %v551
    %v553 = vand.u32 %v552, 4294901760
    %554 = vmatpush.msra.mxu0 %v553
    %v555 = vand.u32 %v64, 4294901760
    %v556 = vsub.f32 %v64, %v555
    %v557 = vand.u32 %v556, 4294901760
    %v558 = vsub.f32 %v556, %v557
    %v559 = vand.u32 %v558, 4294901760
    %560 = vmatpush.msra.mxu0 %v559
    %v561 = vand.u32 %v423, 4294901760
    %562 = vmatmul.f32.gmra.mxu0 %v561
    %v563 = vpop.f32.mrf.mxu0
    %v564 = vadd.f32 %v463, %v563
    %565 = vdwg.mxu0
    %v566 = vand.u32 %v79, 4294901760
    %v567 = vsub.f32 %v79, %v566
    %568 = vmatpush.msra.mxu0 %v567
    %v569 = vand.u32 %v78, 4294901760
    %v570 = vsub.f32 %v78, %v569
    %571 = vmatpush.msra.mxu0 %v570
    %v572 = vand.u32 %v77, 4294901760
    %v573 = vsub.f32 %v77, %v572
    %574 = vmatpush.msra.mxu0 %v573
    %v575 = vand.u32 %v76, 4294901760
    %v576 = vsub.f32 %v76, %v575
    %577 = vmatpush.msra.mxu0 %v576
    %v578 = vand.u32 %v75, 4294901760
    %v579 = vsub.f32 %v75, %v578
    %580 = vmatpush.msra.mxu0 %v579
    %v581 = vand.u32 %v74, 4294901760
    %v582 = vsub.f32 %v74, %v581
    %583 = vmatpush.msra.mxu0 %v582
    %v584 = vand.u32 %v73, 4294901760
    %v585 = vsub.f32 %v73, %v584
    %586 = vmatpush.msra.mxu0 %v585
    %v587 = vand.u32 %v72, 4294901760
    %v588 = vsub.f32 %v72, %v587
    %589 = vmatpush.msra.mxu0 %v588
    %v590 = vand.u32 %v71, 4294901760
    %v591 = vsub.f32 %v71, %v590
    %592 = vmatpush.msra.mxu0 %v591
    %v593 = vand.u32 %v70, 4294901760
    %v594 = vsub.f32 %v70, %v593
    %595 = vmatpush.msra.mxu0 %v594
    %v596 = vand.u32 %v69, 4294901760
    %v597 = vsub.f32 %v69, %v596
    %598 = vmatpush.msra.mxu0 %v597
    %v599 = vand.u32 %v68, 4294901760
    %v600 = vsub.f32 %v68, %v599
    %601 = vmatpush.msra.mxu0 %v600
    %v602 = vand.u32 %v67, 4294901760
    %v603 = vsub.f32 %v67, %v602
    %604 = vmatpush.msra.mxu0 %v603
    %v605 = vand.u32 %v66, 4294901760
    %v606 = vsub.f32 %v66, %v605
    %607 = vmatpush.msra.mxu0 %v606
    %v608 = vand.u32 %v65, 4294901760
    %v609 = vsub.f32 %v65, %v608
    %610 = vmatpush.msra.mxu0 %v609
    %v611 = vand.u32 %v64, 4294901760
    %v612 = vsub.f32 %v64, %v611
    %613 = vmatpush.msra.mxu0 %v612
    %v614 = vand.u32 %v423, 4294901760
    %v615 = vsub.f32 %v423, %v614
    %616 = vmatmul.f32.gmra.mxu0 %v615
    %v617 = vpop.f32.mrf.mxu0
    %v618 = vadd.f32 %v564, %v617
    %619 = vdwg.mxu0
    %v620 = vand.u32 %v79, 4294901760
    %621 = vmatpush.msra.mxu0 %v620
    %v622 = vand.u32 %v78, 4294901760
    %623 = vmatpush.msra.mxu0 %v622
    %v624 = vand.u32 %v77, 4294901760
    %625 = vmatpush.msra.mxu0 %v624
    %v626 = vand.u32 %v76, 4294901760
    %627 = vmatpush.msra.mxu0 %v626
    %v628 = vand.u32 %v75, 4294901760
    %629 = vmatpush.msra.mxu0 %v628
    %v630 = vand.u32 %v74, 4294901760
    %631 = vmatpush.msra.mxu0 %v630
    %v632 = vand.u32 %v73, 4294901760
    %633 = vmatpush.msra.mxu0 %v632
    %v634 = vand.u32 %v72, 4294901760
    %635 = vmatpush.msra.mxu0 %v634
    %v636 = vand.u32 %v71, 4294901760
    %637 = vmatpush.msra.mxu0 %v636
    %v638 = vand.u32 %v70, 4294901760
    %639 = vmatpush.msra.mxu0 %v638
    %v640 = vand.u32 %v69, 4294901760
    %641 = vmatpush.msra.mxu0 %v640
    %v642 = vand.u32 %v68, 4294901760
    %643 = vmatpush.msra.mxu0 %v642
    %v644 = vand.u32 %v67, 4294901760
    %645 = vmatpush.msra.mxu0 %v644
    %v646 = vand.u32 %v66, 4294901760
    %647 = vmatpush.msra.mxu0 %v646
    %v648 = vand.u32 %v65, 4294901760
    %649 = vmatpush.msra.mxu0 %v648
    %v650 = vand.u32 %v64, 4294901760
    %651 = vmatpush.msra.mxu0 %v650
    %v652 = vand.u32 %v423, 4294901760
    %v653 = vsub.f32 %v423, %v652
    %v654 = vand.u32 %v653, 4294901760
    %655 = vmatmul.f32.gmra.mxu0 %v654
    %v656 = vpop.f32.mrf.mxu0
    %v657 = vadd.f32 %v618, %v656
    %658 = vdwg.mxu0
    %v659 = vand.u32 %v79, 4294901760
    %v660 = vsub.f32 %v79, %v659
    %v661 = vand.u32 %v660, 4294901760
    %662 = vmatpush.msra.mxu0 %v661
    %v663 = vand.u32 %v78, 4294901760
    %v664 = vsub.f32 %v78, %v663
    %v665 = vand.u32 %v664, 4294901760
    %666 = vmatpush.msra.mxu0 %v665
    %v667 = vand.u32 %v77, 4294901760
    %v668 = vsub.f32 %v77, %v667
    %v669 = vand.u32 %v668, 4294901760
    %670 = vmatpush.msra.mxu0 %v669
    %v671 = vand.u32 %v76, 4294901760
    %v672 = vsub.f32 %v76, %v671
    %v673 = vand.u32 %v672, 4294901760
    %674 = vmatpush.msra.mxu0 %v673
    %v675 = vand.u32 %v75, 4294901760
    %v676 = vsub.f32 %v75, %v675
    %v677 = vand.u32 %v676, 4294901760
    %678 = vmatpush.msra.mxu0 %v677
    %v679 = vand.u32 %v74, 4294901760
    %v680 = vsub.f32 %v74, %v679
    %v681 = vand.u32 %v680, 4294901760
    %682 = vmatpush.msra.mxu0 %v681
    %v683 = vand.u32 %v73, 4294901760
    %v684 = vsub.f32 %v73, %v683
    %v685 = vand.u32 %v684, 4294901760
    %686 = vmatpush.msra.mxu0 %v685
    %v687 = vand.u32 %v72, 4294901760
    %v688 = vsub.f32 %v72, %v687
    %v689 = vand.u32 %v688, 4294901760
    %690 = vmatpush.msra.mxu0 %v689
    %v691 = vand.u32 %v71, 4294901760
    %v692 = vsub.f32 %v71, %v691
    %v693 = vand.u32 %v692, 4294901760
    %694 = vmatpush.msra.mxu0 %v693
    %v695 = vand.u32 %v70, 4294901760
    %v696 = vsub.f32 %v70, %v695
    %v697 = vand.u32 %v696, 4294901760
    %698 = vmatpush.msra.mxu0 %v697
    %v699 = vand.u32 %v69, 4294901760
    %v700 = vsub.f32 %v69, %v699
    %v701 = vand.u32 %v700, 4294901760
    %702 = vmatpush.msra.mxu0 %v701
    %v703 = vand.u32 %v68, 4294901760
    %v704 = vsub.f32 %v68, %v703
    %v705 = vand.u32 %v704, 4294901760
    %706 = vmatpush.msra.mxu0 %v705
    %v707 = vand.u32 %v67, 4294901760
    %v708 = vsub.f32 %v67, %v707
    %v709 = vand.u32 %v708, 4294901760
    %710 = vmatpush.msra.mxu0 %v709
    %v711 = vand.u32 %v66, 4294901760
    %v712 = vsub.f32 %v66, %v711
    %v713 = vand.u32 %v712, 4294901760
    %714 = vmatpush.msra.mxu0 %v713
    %v715 = vand.u32 %v65, 4294901760
    %v716 = vsub.f32 %v65, %v715
    %v717 = vand.u32 %v716, 4294901760
    %718 = vmatpush.msra.mxu0 %v717
    %v719 = vand.u32 %v64, 4294901760
    %v720 = vsub.f32 %v64, %v719
    %v721 = vand.u32 %v720, 4294901760
    %722 = vmatpush.msra.mxu0 %v721
    %v723 = vand.u32 %v423, 4294901760
    %724 = vmatmul.f32.gmra.mxu0 %v723
    %v725 = vpop.f32.mrf.mxu0
    %v726 = vadd.f32 %v657, %v725
    %727 = vdwg.mxu0
    %v728 = vand.u32 %v79, 4294901760
    %729 = vmatpush.msra.mxu0 %v728
    %v730 = vand.u32 %v78, 4294901760
    %731 = vmatpush.msra.mxu0 %v730
    %v732 = vand.u32 %v77, 4294901760
    %733 = vmatpush.msra.mxu0 %v732
    %v734 = vand.u32 %v76, 4294901760
    %735 = vmatpush.msra.mxu0 %v734
    %v736 = vand.u32 %v75, 4294901760
    %737 = vmatpush.msra.mxu0 %v736
    %v738 = vand.u32 %v74, 4294901760
    %739 = vmatpush.msra.mxu0 %v738
    %v740 = vand.u32 %v73, 4294901760
    %741 = vmatpush.msra.mxu0 %v740
    %v742 = vand.u32 %v72, 4294901760
    %743 = vmatpush.msra.mxu0 %v742
    %v744 = vand.u32 %v71, 4294901760
    %745 = vmatpush.msra.mxu0 %v744
    %v746 = vand.u32 %v70, 4294901760
    %747 = vmatpush.msra.mxu0 %v746
    %v748 = vand.u32 %v69, 4294901760
    %749 = vmatpush.msra.mxu0 %v748
    %v750 = vand.u32 %v68, 4294901760
    %751 = vmatpush.msra.mxu0 %v750
    %v752 = vand.u32 %v67, 4294901760
    %753 = vmatpush.msra.mxu0 %v752
    %v754 = vand.u32 %v66, 4294901760
    %755 = vmatpush.msra.mxu0 %v754
    %v756 = vand.u32 %v65, 4294901760
    %757 = vmatpush.msra.mxu0 %v756
    %v758 = vand.u32 %v64, 4294901760
    %759 = vmatpush.msra.mxu0 %v758
    %v760 = vand.u32 %v423, 4294901760
    %761 = vmatmul.f32.gmra.mxu0 %v760
    %v762 = vpop.f32.mrf.mxu0
    %v763 = vadd.f32 %v726, %v762
    %764 = vdwg.mxu0
    %v765 = vmul.f32 %v763, 0.03125
    %v766 = vadd.f32 %v765, 1e-12
    %v767 = vrsqrt.pop %v766
    %v768 = vmul.f32 %v767, %v766
    %v769 = vmul.f32 %v768, %v767
    %v770 = vmul.f32 0.5, %v769
    %v771 = vsub.f32 1.5, %v770
    %v772 = vmul.f32 %v767, %v771
    %vm773 = vweird.f32 %v766
    %vm774 = vweird.f32 %v767
    %vm775 = vmor %vm773, %vm774
    %v776 = vsel %vm775, %v767, %v772
    %v777 = vld [vmem:[#allocation5] sm:$0x1]
    %v778 = vmul.f32 %v422, %v776
    %v780 = vperm.slane %v777, 0
    %v782 = vmul.f32 %v780, %v778
    %v783 = vld [vmem:[%s2] sm:$0x1]
    %v785 = vperm.slane %v783, 0
    %v787 = vadd.f32 %v782, %v785
    %788 = vst [vmem:[#allocation8] sm:$0xf] %v787
    // Predicated region
    $region30: #{tpu_custom_call.1} parent=1 // pred_check
      _
    $region31: #{tpu_custom_call.1} parent=1 // pred_check_branch
      %790 = sbr.rel (0) target = $region33
    $region32: #{tpu_custom_call.1} parent=1 // pred_region
      %792 = vsyncadd [#allocation4], 0
      %s793 = smul.addr %s8, 4
      %s794 = scalar_lea.hbm %s4, %s793
      %s796 = sshll.u32 [#allocation8], 4
      %s797 = int_to_ptr.vmem [resolvable:$true] %s796
      %s798 = sshll.u32 %s794, 4
      %s799 = int_to_ptr.hbm [resolvable:$true] %s798
      %801 = dma.vmem_to_hbm [thread:$0]  %s797, 64, %s799, [#allocation4]
    $region33: #{tpu_custom_call.1} parent=1 // pred_fallthru
      _
    // Predicated region
    $region34: #{tpu_custom_call.1} parent=1 // pred_check
      _
    $region35: #{tpu_custom_call.1} parent=1 // pred_check_branch
      %803 = sbr.rel (0) target = $region37
    $region36: #{tpu_custom_call.1} parent=1 // pred_region
      %805 = dma.done [#allocation4], 64
    $region37: #{tpu_custom_call.1} parent=1 // pred_fallthru
      _
    %806 = vsyncpa [#allocation3], 1
    %807 = vsyncpa [#allocation6], 1
    %808 = vsyncpa [#allocation4], 1

// kernel: tpu_custom_call.1
$region0: #{tpu_custom_call.1}
  #allocation0 [shape = 'u32[]', space=smem, size = 0x4, offset = 0x4, fixed_abs, tag = 'smem constant byte address 0x4 - core index']
  #allocation1 [shape = 'u32[72,128]{1,0:T(1,128)}', space=vmem, size = 0x9000, scoped, tag = 'internal scratch']
  %s0 = inlined_call_operand.hbm [shape: f32[4,128], index: 0, kind: input, shape index: {}]
  %s1 = inlined_call_operand.hbm [shape: f32[1,128], index: 1, kind: input, shape index: {}]
  %s2 = inlined_call_operand.vmem [shape: f32[1,128], index: 2, kind: input, shape index: {}]
  %s3 = inlined_call_operand.hbm [shape: f32[128,128], index: 3, kind: input, shape index: {}]
  %s4 = inlined_call_operand.hbm [shape: f32[4,128], index: 4, kind: output, shape index: {}]
  %s5 = sld [smem:[#allocation0]]
  $region38: #{tpu_custom_call.1} parent=0
    _
  %s7 = ssub.s32 1, %s5
  %s8 = scalar_select 0, %s7, %s5
  $region1: #{tpu_custom_call.1} parent=0
    #allocation2 [shape = 'u8[2048]{0}', space=vmem, size = 0x800, scoped, tag = 'input window, operand 0, single buffered']
    #allocation3 [shape = 's32[1]{0}', space=sflag, size = 0x4, scoped, tag = 'scoped memory for tpu_custom_call.1']
    #allocation4 [shape = 's32[1]{0}', space=sflag, size = 0x4, scoped, tag = 'scoped memory for tpu_custom_call.1']
    #allocation5 [shape = 'u8[512]{0}', space=vmem, size = 0x400, scoped, tag = 'input window, operand 1, single buffered']
    #allocation6 [shape = 's32[1]{0}', space=sflag, size = 0x4, scoped, tag = 'scoped memory for tpu_custom_call.1']
    #allocation7 [shape = 'u8[65536]{0}', space=vmem, size = 0x10000, scoped, tag = 'input window, operand 3, single buffered']
    #allocation8 [shape = 'u8[2048]{0}', space=vmem, size = 0x800, scoped, tag = 'output window, operand 0, single buffered']
    %9 = vsyncpa [#allocation3], 0
    %10 = vsyncpa [#allocation6], 0
    %11 = vsyncpa [#allocation4], 0
    // Predicated region
    $region2: #{tpu_custom_call.1} parent=1 // pred_check
      _
    $region3: #{tpu_custom_call.1} parent=1 // pred_check_branch
      %13 = sbr.rel (0) target = $region5
    $region4: #{tpu_custom_call.1} parent=1 // pred_region
      %15 = vsyncadd [#allocation3], 0
      %s17 = sshll.u32 %s0, 4
      %s18 = int_to_ptr.hbm [resolvable:$true] %s17
      %s19 = sshll.u32 [#allocation2], 4
      %s20 = int_to_ptr.vmem [resolvable:$true] %s19
      %22 = dma.hbm_to_vmem [thread:$0]  %s18, 64, %s20, [#allocation3]
    $region5: #{tpu_custom_call.1} parent=1 // pred_fallthru
      _
    // Predicated region
    $region6: #{tpu_custom_call.1} parent=1 // pred_check
      _
    $region7: #{tpu_custom_call.1} parent=1 // pred_check_branch
      %24 = sbr.rel (0) target = $region9
    $region8: #{tpu_custom_call.1} parent=1 // pred_region
      %26 = vsyncadd [#allocation6], 0
      %s28 = sshll.u32 %s1, 4
      %s29 = int_to_ptr.hbm [resolvable:$true] %s28
      %s30 = sshll.u32 [#allocation5], 4
      %s31 = int_to_ptr.vmem [resolvable:$true] %s30
      %33 = dma.hbm_to_vmem [thread:$0]  %s29, 16, %s31, [#allocation6]
    $region9: #{tpu_custom_call.1} parent=1 // pred_fallthru
      _
    // Predicated region
    $region10: #{tpu_custom_call.1} parent=1 // pred_check
      _
    $region11: #{tpu_custom_call.1} parent=1 // pred_check_branch
      %35 = sbr.rel (0) target = $region13
    $region12: #{tpu_custom_call.1} parent=1 // pred_region
      _
    $region13: #{tpu_custom_call.1} parent=1 // pred_fallthru
      _
    // Predicated region
    $region14: #{tpu_custom_call.1} parent=1 // pred_check
      _
    $region15: #{tpu_custom_call.1} parent=1 // pred_check_branch
      %37 = sbr.rel (0) target = $region17
    $region16: #{tpu_custom_call.1} parent=1 // pred_region
      %39 = vsyncadd [#allocation6], 0
      %s40 = sshll.u32 %s3, 4
      %s41 = int_to_ptr.hbm [resolvable:$true] %s40
      %s42 = sshll.u32 [#allocation7], 4
      %s43 = int_to_ptr.vmem [resolvable:$true] %s42
      %48 = dma.hbm_to_vmem [thread:$0]  %s41, 2048, %s43, [#allocation6], 128, 128, 8
    $region17: #{tpu_custom_call.1} parent=1 // pred_fallthru
      _
    // Predicated region
    $region18: #{tpu_custom_call.1} parent=1 // pred_check
      _
    $region19: #{tpu_custom_call.1} parent=1 // pred_check_branch
      %50 = sbr.rel (0) target = $region21
    $region20: #{tpu_custom_call.1} parent=1 // pred_region
      %52 = dma.done [#allocation3], 64
    $region21: #{tpu_custom_call.1} parent=1 // pred_fallthru
      _
    // Predicated region
    $region22: #{tpu_custom_call.1} parent=1 // pred_check
      _
    $region23: #{tpu_custom_call.1} parent=1 // pred_check_branch
      %54 = sbr.rel (0) target = $region25
    $region24: #{tpu_custom_call.1} parent=1 // pred_region
      %56 = dma.done [#allocation6], 16
    $region25: #{tpu_custom_call.1} parent=1 // pred_fallthru
      _
    // Predicated region
    $region26: #{tpu_custom_call.1} parent=1 // pred_check
      _
    $region27: #{tpu_custom_call.1} parent=1 // pred_check_branch
      %58 = sbr.rel (0) target = $region29
    $region28: #{tpu_custom_call.1} parent=1 // pred_region
      %60 = dma.done [#allocation6], 2048
    $region29: #{tpu_custom_call.1} parent=1 // pred_fallthru
      _
    %v61 = vld [vmem:[#allocation2] sm:$0xf]
    %v62 = vld [vmem:[#allocation7] sm:$0xff]
    %v63 = vld [vmem:[#allocation7 + $0x8] sm:$0xff]
    %v64 = vld [vmem:[#allocation7 + $0x10] sm:$0xff]
    %v65 = vld [vmem:[#allocation7 + $0x18] sm:$0xff]
    %v66 = vld [vmem:[#allocation7 + $0x20] sm:$0xff]
    %v67 = vld [vmem:[#allocation7 + $0x28] sm:$0xff]
    %v68 = vld [vmem:[#allocation7 + $0x30] sm:$0xff]
    %v69 = vld [vmem:[#allocation7 + $0x38] sm:$0xff]
    %v70 = vld [vmem:[#allocation7 + $0x40] sm:$0xff]
    %v71 = vld [vmem:[#allocation7 + $0x48] sm:$0xff]
    %v72 = vld [vmem:[#allocation7 + $0x50] sm:$0xff]
    %v73 = vld [vmem:[#allocation7 + $0x58] sm:$0xff]
    %v74 = vld [vmem:[#allocation7 + $0x60] sm:$0xff]
    %v75 = vld [vmem:[#allocation7 + $0x68] sm:$0xff]
    %v76 = vld [vmem:[#allocation7 + $0x70] sm:$0xff]
    %v77 = vld [vmem:[#allocation7 + $0x78] sm:$0xff]
    %v78 = vand.u32 %v77, 4294901760
    %79 = vmatpush.msra.mxu0 %v78
    %v80 = vand.u32 %v76, 4294901760
    %81 = vmatpush.msra.mxu0 %v80
    %v82 = vand.u32 %v75, 4294901760
    %83 = vmatpush.msra.mxu0 %v82
    %v84 = vand.u32 %v74, 4294901760
    %85 = vmatpush.msra.mxu0 %v84
    %v86 = vand.u32 %v73, 4294901760
    %87 = vmatpush.msra.mxu0 %v86
    %v88 = vand.u32 %v72, 4294901760
    %89 = vmatpush.msra.mxu0 %v88
    %v90 = vand.u32 %v71, 4294901760
    %91 = vmatpush.msra.mxu0 %v90
    %v92 = vand.u32 %v70, 4294901760
    %93 = vmatpush.msra.mxu0 %v92
    %v94 = vand.u32 %v69, 4294901760
    %95 = vmatpush.msra.mxu0 %v94
    %v96 = vand.u32 %v68, 4294901760
    %97 = vmatpush.msra.mxu0 %v96
    %v98 = vand.u32 %v67, 4294901760
    %99 = vmatpush.msra.mxu0 %v98
    %v100 = vand.u32 %v66, 4294901760
    %101 = vmatpush.msra.mxu0 %v100
    %v102 = vand.u32 %v65, 4294901760
    %103 = vmatpush.msra.mxu0 %v102
    %v104 = vand.u32 %v64, 4294901760
    %105 = vmatpush.msra.mxu0 %v104
    %v106 = vand.u32 %v63, 4294901760
    %107 = vmatpush.msra.mxu0 %v106
    %v108 = vand.u32 %v62, 4294901760
    %109 = vmatpush.msra.mxu0 %v108
    %v110 = vand.u32 %v61, 4294901760
    %v111 = vsub.f32 %v61, %v110
    %v112 = vand.u32 %v111, 4294901760
    %v113 = vsub.f32 %v111, %v112
    %v114 = vand.u32 %v113, 4294901760
    %115 = vmatmul.f32.gmra.mxu0 %v114
    %v116 = vpop.f32.mrf.mxu0
    %v117 = vadd.f32 0.0, %v116
    %118 = vdwg.mxu0
    %v119 = vand.u32 %v77, 4294901760
    %v120 = vsub.f32 %v77, %v119
    %v121 = vand.u32 %v120, 4294901760
    %v122 = vsub.f32 %v120, %v121
    %v123 = vand.u32 %v122, 4294901760
    %124 = vmatpush.msra.mxu0 %v123
    %v125 = vand.u32 %v76, 4294901760
    %v126 = vsub.f32 %v76, %v125
    %v127 = vand.u32 %v126, 4294901760
    %v128 = vsub.f32 %v126, %v127
    %v129 = vand.u32 %v128, 4294901760
    %130 = vmatpush.msra.mxu0 %v129
    %v131 = vand.u32 %v75, 4294901760
    %v132 = vsub.f32 %v75, %v131
    %v133 = vand.u32 %v132, 4294901760
    %v134 = vsub.f32 %v132, %v133
    %v135 = vand.u32 %v134, 4294901760
    %136 = vmatpush.msra.mxu0 %v135
    %v137 = vand.u32 %v74, 4294901760
    %v138 = vsub.f32 %v74, %v137
    %v139 = vand.u32 %v138, 4294901760
    %v140 = vsub.f32 %v138, %v139
    %v141 = vand.u32 %v140, 4294901760
    %142 = vmatpush.msra.mxu0 %v141
    %v143 = vand.u32 %v73, 4294901760
    %v144 = vsub.f32 %v73, %v143
    %v145 = vand.u32 %v144, 4294901760
    %v146 = vsub.f32 %v144, %v145
    %v147 = vand.u32 %v146, 4294901760
    %148 = vmatpush.msra.mxu0 %v147
    %v149 = vand.u32 %v72, 4294901760
    %v150 = vsub.f32 %v72, %v149
    %v151 = vand.u32 %v150, 4294901760
    %v152 = vsub.f32 %v150, %v151
    %v153 = vand.u32 %v152, 4294901760
    %154 = vmatpush.msra.mxu0 %v153
    %v155 = vand.u32 %v71, 4294901760
    %v156 = vsub.f32 %v71, %v155
    %v157 = vand.u32 %v156, 4294901760
    %v158 = vsub.f32 %v156, %v157
    %v159 = vand.u32 %v158, 4294901760
    %160 = vmatpush.msra.mxu0 %v159
    %v161 = vand.u32 %v70, 4294901760
    %v162 = vsub.f32 %v70, %v161
    %v163 = vand.u32 %v162, 4294901760
    %v164 = vsub.f32 %v162, %v163
    %v165 = vand.u32 %v164, 4294901760
    %166 = vmatpush.msra.mxu0 %v165
    %v167 = vand.u32 %v69, 4294901760
    %v168 = vsub.f32 %v69, %v167
    %v169 = vand.u32 %v168, 4294901760
    %v170 = vsub.f32 %v168, %v169
    %v171 = vand.u32 %v170, 4294901760
    %172 = vmatpush.msra.mxu0 %v171
    %v173 = vand.u32 %v68, 4294901760
    %v174 = vsub.f32 %v68, %v173
    %v175 = vand.u32 %v174, 4294901760
    %v176 = vsub.f32 %v174, %v175
    %v177 = vand.u32 %v176, 4294901760
    %178 = vmatpush.msra.mxu0 %v177
    %v179 = vand.u32 %v67, 4294901760
    %v180 = vsub.f32 %v67, %v179
    %v181 = vand.u32 %v180, 4294901760
    %v182 = vsub.f32 %v180, %v181
    %v183 = vand.u32 %v182, 4294901760
    %184 = vmatpush.msra.mxu0 %v183
    %v185 = vand.u32 %v66, 4294901760
    %v186 = vsub.f32 %v66, %v185
    %v187 = vand.u32 %v186, 4294901760
    %v188 = vsub.f32 %v186, %v187
    %v189 = vand.u32 %v188, 4294901760
    %190 = vmatpush.msra.mxu0 %v189
    %v191 = vand.u32 %v65, 4294901760
    %v192 = vsub.f32 %v65, %v191
    %v193 = vand.u32 %v192, 4294901760
    %v194 = vsub.f32 %v192, %v193
    %v195 = vand.u32 %v194, 4294901760
    %196 = vmatpush.msra.mxu0 %v195
    %v197 = vand.u32 %v64, 4294901760
    %v198 = vsub.f32 %v64, %v197
    %v199 = vand.u32 %v198, 4294901760
    %v200 = vsub.f32 %v198, %v199
    %v201 = vand.u32 %v200, 4294901760
    %202 = vmatpush.msra.mxu0 %v201
    %v203 = vand.u32 %v63, 4294901760
    %v204 = vsub.f32 %v63, %v203
    %v205 = vand.u32 %v204, 4294901760
    %v206 = vsub.f32 %v204, %v205
    %v207 = vand.u32 %v206, 4294901760
    %208 = vmatpush.msra.mxu0 %v207
    %v209 = vand.u32 %v62, 4294901760
    %v210 = vsub.f32 %v62, %v209
    %v211 = vand.u32 %v210, 4294901760
    %v212 = vsub.f32 %v210, %v211
    %v213 = vand.u32 %v212, 4294901760
    %214 = vmatpush.msra.mxu0 %v213
    %v215 = vand.u32 %v61, 4294901760
    %216 = vmatmul.f32.gmra.mxu0 %v215
    %v217 = vpop.f32.mrf.mxu0
    %v218 = vadd.f32 %v117, %v217
    %219 = vdwg.mxu0
    %v220 = vand.u32 %v77, 4294901760
    %v221 = vsub.f32 %v77, %v220
    %222 = vmatpush.msra.mxu0 %v221
    %v223 = vand.u32 %v76, 4294901760
    %v224 = vsub.f32 %v76, %v223
    %225 = vmatpush.msra.mxu0 %v224
    %v226 = vand.u32 %v75, 4294901760
    %v227 = vsub.f32 %v75, %v226
    %228 = vmatpush.msra.mxu0 %v227
    %v229 = vand.u32 %v74, 4294901760
    %v230 = vsub.f32 %v74, %v229
    %231 = vmatpush.msra.mxu0 %v230
    %v232 = vand.u32 %v73, 4294901760
    %v233 = vsub.f32 %v73, %v232
    %234 = vmatpush.msra.mxu0 %v233
    %v235 = vand.u32 %v72, 4294901760
    %v236 = vsub.f32 %v72, %v235
    %237 = vmatpush.msra.mxu0 %v236
    %v238 = vand.u32 %v71, 4294901760
    %v239 = vsub.f32 %v71, %v238
    %240 = vmatpush.msra.mxu0 %v239
    %v241 = vand.u32 %v70, 4294901760
    %v242 = vsub.f32 %v70, %v241
    %243 = vmatpush.msra.mxu0 %v242
    %v244 = vand.u32 %v69, 4294901760
    %v245 = vsub.f32 %v69, %v244
    %246 = vmatpush.msra.mxu0 %v245
    %v247 = vand.u32 %v68, 4294901760
    %v248 = vsub.f32 %v68, %v247
    %249 = vmatpush.msra.mxu0 %v248
    %v250 = vand.u32 %v67, 4294901760
    %v251 = vsub.f32 %v67, %v250
    %252 = vmatpush.msra.mxu0 %v251
    %v253 = vand.u32 %v66, 4294901760
    %v254 = vsub.f32 %v66, %v253
    %255 = vmatpush.msra.mxu0 %v254
    %v256 = vand.u32 %v65, 4294901760
    %v257 = vsub.f32 %v65, %v256
    %258 = vmatpush.msra.mxu0 %v257
    %v259 = vand.u32 %v64, 4294901760
    %v260 = vsub.f32 %v64, %v259
    %261 = vmatpush.msra.mxu0 %v260
    %v262 = vand.u32 %v63, 4294901760
    %v263 = vsub.f32 %v63, %v262
    %264 = vmatpush.msra.mxu0 %v263
    %v265 = vand.u32 %v62, 4294901760
    %v266 = vsub.f32 %v62, %v265
    %267 = vmatpush.msra.mxu0 %v266
    %v268 = vand.u32 %v61, 4294901760
    %v269 = vsub.f32 %v61, %v268
    %270 = vmatmul.f32.gmra.mxu0 %v269
    %v271 = vpop.f32.mrf.mxu0
    %v272 = vadd.f32 %v218, %v271
    %273 = vdwg.mxu0
    %v274 = vand.u32 %v77, 4294901760
    %275 = vmatpush.msra.mxu0 %v274
    %v276 = vand.u32 %v76, 4294901760
    %277 = vmatpush.msra.mxu0 %v276
    %v278 = vand.u32 %v75, 4294901760
    %279 = vmatpush.msra.mxu0 %v278
    %v280 = vand.u32 %v74, 4294901760
    %281 = vmatpush.msra.mxu0 %v280
    %v282 = vand.u32 %v73, 4294901760
    %283 = vmatpush.msra.mxu0 %v282
    %v284 = vand.u32 %v72, 4294901760
    %285 = vmatpush.msra.mxu0 %v284
    %v286 = vand.u32 %v71, 4294901760
    %287 = vmatpush.msra.mxu0 %v286
    %v288 = vand.u32 %v70, 4294901760
    %289 = vmatpush.msra.mxu0 %v288
    %v290 = vand.u32 %v69, 4294901760
    %291 = vmatpush.msra.mxu0 %v290
    %v292 = vand.u32 %v68, 4294901760
    %293 = vmatpush.msra.mxu0 %v292
    %v294 = vand.u32 %v67, 4294901760
    %295 = vmatpush.msra.mxu0 %v294
    %v296 = vand.u32 %v66, 4294901760
    %297 = vmatpush.msra.mxu0 %v296
    %v298 = vand.u32 %v65, 4294901760
    %299 = vmatpush.msra.mxu0 %v298
    %v300 = vand.u32 %v64, 4294901760
    %301 = vmatpush.msra.mxu0 %v300
    %v302 = vand.u32 %v63, 4294901760
    %303 = vmatpush.msra.mxu0 %v302
    %v304 = vand.u32 %v62, 4294901760
    %305 = vmatpush.msra.mxu0 %v304
    %v306 = vand.u32 %v61, 4294901760
    %v307 = vsub.f32 %v61, %v306
    %v308 = vand.u32 %v307, 4294901760
    %309 = vmatmul.f32.gmra.mxu0 %v308
    %v310 = vpop.f32.mrf.mxu0
    %v311 = vadd.f32 %v272, %v310
    %312 = vdwg.mxu0
    %v313 = vand.u32 %v77, 4294901760
    %v314 = vsub.f32 %v77, %v313
    %v315 = vand.u32 %v314, 4294901760
    %316 = vmatpush.msra.mxu0 %v315
    %v317 = vand.u32 %v76, 4294901760
    %v318 = vsub.f32 %v76, %v317
    %v319 = vand.u32 %v318, 4294901760
    %320 = vmatpush.msra.mxu0 %v319
    %v321 = vand.u32 %v75, 4294901760
    %v322 = vsub.f32 %v75, %v321
    %v323 = vand.u32 %v322, 4294901760
    %324 = vmatpush.msra.mxu0 %v323
    %v325 = vand.u32 %v74, 4294901760
    %v326 = vsub.f32 %v74, %v325
    %v327 = vand.u32 %v326, 4294901760
    %328 = vmatpush.msra.mxu0 %v327
    %v329 = vand.u32 %v73, 4294901760
    %v330 = vsub.f32 %v73, %v329
    %v331 = vand.u32 %v330, 4294901760
    %332 = vmatpush.msra.mxu0 %v331
    %v333 = vand.u32 %v72, 4294901760
    %v334 = vsub.f32 %v72, %v333
    %v335 = vand.u32 %v334, 4294901760
    %336 = vmatpush.msra.mxu0 %v335
    %v337 = vand.u32 %v71, 4294901760
    %v338 = vsub.f32 %v71, %v337
    %v339 = vand.u32 %v338, 4294901760
    %340 = vmatpush.msra.mxu0 %v339
    %v341 = vand.u32 %v70, 4294901760
    %v342 = vsub.f32 %v70, %v341
    %v343 = vand.u32 %v342, 4294901760
    %344 = vmatpush.msra.mxu0 %v343
    %v345 = vand.u32 %v69, 4294901760
    %v346 = vsub.f32 %v69, %v345
    %v347 = vand.u32 %v346, 4294901760
    %348 = vmatpush.msra.mxu0 %v347
    %v349 = vand.u32 %v68, 4294901760
    %v350 = vsub.f32 %v68, %v349
    %v351 = vand.u32 %v350, 4294901760
    %352 = vmatpush.msra.mxu0 %v351
    %v353 = vand.u32 %v67, 4294901760
    %v354 = vsub.f32 %v67, %v353
    %v355 = vand.u32 %v354, 4294901760
    %356 = vmatpush.msra.mxu0 %v355
    %v357 = vand.u32 %v66, 4294901760
    %v358 = vsub.f32 %v66, %v357
    %v359 = vand.u32 %v358, 4294901760
    %360 = vmatpush.msra.mxu0 %v359
    %v361 = vand.u32 %v65, 4294901760
    %v362 = vsub.f32 %v65, %v361
    %v363 = vand.u32 %v362, 4294901760
    %364 = vmatpush.msra.mxu0 %v363
    %v365 = vand.u32 %v64, 4294901760
    %v366 = vsub.f32 %v64, %v365
    %v367 = vand.u32 %v366, 4294901760
    %368 = vmatpush.msra.mxu0 %v367
    %v369 = vand.u32 %v63, 4294901760
    %v370 = vsub.f32 %v63, %v369
    %v371 = vand.u32 %v370, 4294901760
    %372 = vmatpush.msra.mxu0 %v371
    %v373 = vand.u32 %v62, 4294901760
    %v374 = vsub.f32 %v62, %v373
    %v375 = vand.u32 %v374, 4294901760
    %376 = vmatpush.msra.mxu0 %v375
    %v377 = vand.u32 %v61, 4294901760
    %378 = vmatmul.f32.gmra.mxu0 %v377
    %v379 = vpop.f32.mrf.mxu0
    %v380 = vadd.f32 %v311, %v379
    %381 = vdwg.mxu0
    %v382 = vand.u32 %v77, 4294901760
    %383 = vmatpush.msra.mxu0 %v382
    %v384 = vand.u32 %v76, 4294901760
    %385 = vmatpush.msra.mxu0 %v384
    %v386 = vand.u32 %v75, 4294901760
    %387 = vmatpush.msra.mxu0 %v386
    %v388 = vand.u32 %v74, 4294901760
    %389 = vmatpush.msra.mxu0 %v388
    %v390 = vand.u32 %v73, 4294901760
    %391 = vmatpush.msra.mxu0 %v390
    %v392 = vand.u32 %v72, 4294901760
    %393 = vmatpush.msra.mxu0 %v392
    %v394 = vand.u32 %v71, 4294901760
    %395 = vmatpush.msra.mxu0 %v394
    %v396 = vand.u32 %v70, 4294901760
    %397 = vmatpush.msra.mxu0 %v396
    %v398 = vand.u32 %v69, 4294901760
    %399 = vmatpush.msra.mxu0 %v398
    %v400 = vand.u32 %v68, 4294901760
    %401 = vmatpush.msra.mxu0 %v400
    %v402 = vand.u32 %v67, 4294901760
    %403 = vmatpush.msra.mxu0 %v402
    %v404 = vand.u32 %v66, 4294901760
    %405 = vmatpush.msra.mxu0 %v404
    %v406 = vand.u32 %v65, 4294901760
    %407 = vmatpush.msra.mxu0 %v406
    %v408 = vand.u32 %v64, 4294901760
    %409 = vmatpush.msra.mxu0 %v408
    %v410 = vand.u32 %v63, 4294901760
    %411 = vmatpush.msra.mxu0 %v410
    %v412 = vand.u32 %v62, 4294901760
    %413 = vmatpush.msra.mxu0 %v412
    %v414 = vand.u32 %v61, 4294901760
    %415 = vmatmul.f32.gmra.mxu0 %v414
    %v416 = vpop.f32.mrf.mxu0
    %v417 = vadd.f32 %v380, %v416
    %418 = vdwg.mxu0
    %v419 = vmul.f32 %v417, 0.03125
    %v420 = vsub.f32 %v61, %v419
    %v421 = vmul.f32 %v420, %v420
    %v422 = vand.u32 %v77, 4294901760
    %423 = vmatpush.msra.mxu0 %v422
    %v424 = vand.u32 %v76, 4294901760
    %425 = vmatpush.msra.mxu0 %v424
    %v426 = vand.u32 %v75, 4294901760
    %427 = vmatpush.msra.mxu0 %v426
    %v428 = vand.u32 %v74, 4294901760
    %429 = vmatpush.msra.mxu0 %v428
    %v430 = vand.u32 %v73, 4294901760
    %431 = vmatpush.msra.mxu0 %v430
    %v432 = vand.u32 %v72, 4294901760
    %433 = vmatpush.msra.mxu0 %v432
    %v434 = vand.u32 %v71, 4294901760
    %435 = vmatpush.msra.mxu0 %v434
    %v436 = vand.u32 %v70, 4294901760
    %437 = vmatpush.msra.mxu0 %v436
    %v438 = vand.u32 %v69, 4294901760
    %439 = vmatpush.msra.mxu0 %v438
    %v440 = vand.u32 %v68, 4294901760
    %441 = vmatpush.msra.mxu0 %v440
    %v442 = vand.u32 %v67, 4294901760
    %443 = vmatpush.msra.mxu0 %v442
    %v444 = vand.u32 %v66, 4294901760
    %445 = vmatpush.msra.mxu0 %v444
    %v446 = vand.u32 %v65, 4294901760
    %447 = vmatpush.msra.mxu0 %v446
    %v448 = vand.u32 %v64, 4294901760
    %449 = vmatpush.msra.mxu0 %v448
    %v450 = vand.u32 %v63, 4294901760
    %451 = vmatpush.msra.mxu0 %v450
    %v452 = vand.u32 %v62, 4294901760
    %453 = vmatpush.msra.mxu0 %v452
    %v454 = vand.u32 %v421, 4294901760
    %v455 = vsub.f32 %v421, %v454
    %v456 = vand.u32 %v455, 4294901760
    %v457 = vsub.f32 %v455, %v456
    %v458 = vand.u32 %v457, 4294901760
    %459 = vmatmul.f32.gmra.mxu0 %v458
    %v460 = vpop.f32.mrf.mxu0
    %v461 = vadd.f32 0.0, %v460
    %462 = vdwg.mxu0
    %v463 = vand.u32 %v77, 4294901760
    %v464 = vsub.f32 %v77, %v463
    %v465 = vand.u32 %v464, 4294901760
    %v466 = vsub.f32 %v464, %v465
    %v467 = vand.u32 %v466, 4294901760
    %468 = vmatpush.msra.mxu0 %v467
    %v469 = vand.u32 %v76, 4294901760
    %v470 = vsub.f32 %v76, %v469
    %v471 = vand.u32 %v470, 4294901760
    %v472 = vsub.f32 %v470, %v471
    %v473 = vand.u32 %v472, 4294901760
    %474 = vmatpush.msra.mxu0 %v473
    %v475 = vand.u32 %v75, 4294901760
    %v476 = vsub.f32 %v75, %v475
    %v477 = vand.u32 %v476, 4294901760
    %v478 = vsub.f32 %v476, %v477
    %v479 = vand.u32 %v478, 4294901760
    %480 = vmatpush.msra.mxu0 %v479
    %v481 = vand.u32 %v74, 4294901760
    %v482 = vsub.f32 %v74, %v481
    %v483 = vand.u32 %v482, 4294901760
    %v484 = vsub.f32 %v482, %v483
    %v485 = vand.u32 %v484, 4294901760
    %486 = vmatpush.msra.mxu0 %v485
    %v487 = vand.u32 %v73, 4294901760
    %v488 = vsub.f32 %v73, %v487
    %v489 = vand.u32 %v488, 4294901760
    %v490 = vsub.f32 %v488, %v489
    %v491 = vand.u32 %v490, 4294901760
    %492 = vmatpush.msra.mxu0 %v491
    %v493 = vand.u32 %v72, 4294901760
    %v494 = vsub.f32 %v72, %v493
    %v495 = vand.u32 %v494, 4294901760
    %v496 = vsub.f32 %v494, %v495
    %v497 = vand.u32 %v496, 4294901760
    %498 = vmatpush.msra.mxu0 %v497
    %v499 = vand.u32 %v71, 4294901760
    %v500 = vsub.f32 %v71, %v499
    %v501 = vand.u32 %v500, 4294901760
    %v502 = vsub.f32 %v500, %v501
    %v503 = vand.u32 %v502, 4294901760
    %504 = vmatpush.msra.mxu0 %v503
    %v505 = vand.u32 %v70, 4294901760
    %v506 = vsub.f32 %v70, %v505
    %v507 = vand.u32 %v506, 4294901760
    %v508 = vsub.f32 %v506, %v507
    %v509 = vand.u32 %v508, 4294901760
    %510 = vmatpush.msra.mxu0 %v509
    %v511 = vand.u32 %v69, 4294901760
    %v512 = vsub.f32 %v69, %v511
    %v513 = vand.u32 %v512, 4294901760
    %v514 = vsub.f32 %v512, %v513
    %v515 = vand.u32 %v514, 4294901760
    %516 = vmatpush.msra.mxu0 %v515
    %v517 = vand.u32 %v68, 4294901760
    %v518 = vsub.f32 %v68, %v517
    %v519 = vand.u32 %v518, 4294901760
    %v520 = vsub.f32 %v518, %v519
    %v521 = vand.u32 %v520, 4294901760
    %522 = vmatpush.msra.mxu0 %v521
    %v523 = vand.u32 %v67, 4294901760
    %v524 = vsub.f32 %v67, %v523
    %v525 = vand.u32 %v524, 4294901760
    %v526 = vsub.f32 %v524, %v525
    %v527 = vand.u32 %v526, 4294901760
    %528 = vmatpush.msra.mxu0 %v527
    %v529 = vand.u32 %v66, 4294901760
    %v530 = vsub.f32 %v66, %v529
    %v531 = vand.u32 %v530, 4294901760
    %v532 = vsub.f32 %v530, %v531
    %v533 = vand.u32 %v532, 4294901760
    %534 = vmatpush.msra.mxu0 %v533
    %v535 = vand.u32 %v65, 4294901760
    %v536 = vsub.f32 %v65, %v535
    %v537 = vand.u32 %v536, 4294901760
    %v538 = vsub.f32 %v536, %v537
    %v539 = vand.u32 %v538, 4294901760
    %540 = vmatpush.msra.mxu0 %v539
    %v541 = vand.u32 %v64, 4294901760
    %v542 = vsub.f32 %v64, %v541
    %v543 = vand.u32 %v542, 4294901760
    %v544 = vsub.f32 %v542, %v543
    %v545 = vand.u32 %v544, 4294901760
    %546 = vmatpush.msra.mxu0 %v545
    %v547 = vand.u32 %v63, 4294901760
    %v548 = vsub.f32 %v63, %v547
    %v549 = vand.u32 %v548, 4294901760
    %v550 = vsub.f32 %v548, %v549
    %v551 = vand.u32 %v550, 4294901760
    %552 = vmatpush.msra.mxu0 %v551
    %v553 = vand.u32 %v62, 4294901760
    %v554 = vsub.f32 %v62, %v553
    %v555 = vand.u32 %v554, 4294901760
    %v556 = vsub.f32 %v554, %v555
    %v557 = vand.u32 %v556, 4294901760
    %558 = vmatpush.msra.mxu0 %v557
    %v559 = vand.u32 %v421, 4294901760
    %560 = vmatmul.f32.gmra.mxu0 %v559
    %v561 = vpop.f32.mrf.mxu0
    %v562 = vadd.f32 %v461, %v561
    %563 = vdwg.mxu0
    %v564 = vand.u32 %v77, 4294901760
    %v565 = vsub.f32 %v77, %v564
    %566 = vmatpush.msra.mxu0 %v565
    %v567 = vand.u32 %v76, 4294901760
    %v568 = vsub.f32 %v76, %v567
    %569 = vmatpush.msra.mxu0 %v568
    %v570 = vand.u32 %v75, 4294901760
    %v571 = vsub.f32 %v75, %v570
    %572 = vmatpush.msra.mxu0 %v571
    %v573 = vand.u32 %v74, 4294901760
    %v574 = vsub.f32 %v74, %v573
    %575 = vmatpush.msra.mxu0 %v574
    %v576 = vand.u32 %v73, 4294901760
    %v577 = vsub.f32 %v73, %v576
    %578 = vmatpush.msra.mxu0 %v577
    %v579 = vand.u32 %v72, 4294901760
    %v580 = vsub.f32 %v72, %v579
    %581 = vmatpush.msra.mxu0 %v580
    %v582 = vand.u32 %v71, 4294901760
    %v583 = vsub.f32 %v71, %v582
    %584 = vmatpush.msra.mxu0 %v583
    %v585 = vand.u32 %v70, 4294901760
    %v586 = vsub.f32 %v70, %v585
    %587 = vmatpush.msra.mxu0 %v586
    %v588 = vand.u32 %v69, 4294901760
    %v589 = vsub.f32 %v69, %v588
    %590 = vmatpush.msra.mxu0 %v589
    %v591 = vand.u32 %v68, 4294901760
    %v592 = vsub.f32 %v68, %v591
    %593 = vmatpush.msra.mxu0 %v592
    %v594 = vand.u32 %v67, 4294901760
    %v595 = vsub.f32 %v67, %v594
    %596 = vmatpush.msra.mxu0 %v595
    %v597 = vand.u32 %v66, 4294901760
    %v598 = vsub.f32 %v66, %v597
    %599 = vmatpush.msra.mxu0 %v598
    %v600 = vand.u32 %v65, 4294901760
    %v601 = vsub.f32 %v65, %v600
    %602 = vmatpush.msra.mxu0 %v601
    %v603 = vand.u32 %v64, 4294901760
    %v604 = vsub.f32 %v64, %v603
    %605 = vmatpush.msra.mxu0 %v604
    %v606 = vand.u32 %v63, 4294901760
    %v607 = vsub.f32 %v63, %v606
    %608 = vmatpush.msra.mxu0 %v607
    %v609 = vand.u32 %v62, 4294901760
    %v610 = vsub.f32 %v62, %v609
    %611 = vmatpush.msra.mxu0 %v610
    %v612 = vand.u32 %v421, 4294901760
    %v613 = vsub.f32 %v421, %v612
    %614 = vmatmul.f32.gmra.mxu0 %v613
    %v615 = vpop.f32.mrf.mxu0
    %v616 = vadd.f32 %v562, %v615
    %617 = vdwg.mxu0
    %v618 = vand.u32 %v77, 4294901760
    %619 = vmatpush.msra.mxu0 %v618
    %v620 = vand.u32 %v76, 4294901760
    %621 = vmatpush.msra.mxu0 %v620
    %v622 = vand.u32 %v75, 4294901760
    %623 = vmatpush.msra.mxu0 %v622
    %v624 = vand.u32 %v74, 4294901760
    %625 = vmatpush.msra.mxu0 %v624
    %v626 = vand.u32 %v73, 4294901760
    %627 = vmatpush.msra.mxu0 %v626
    %v628 = vand.u32 %v72, 4294901760
    %629 = vmatpush.msra.mxu0 %v628
    %v630 = vand.u32 %v71, 4294901760
    %631 = vmatpush.msra.mxu0 %v630
    %v632 = vand.u32 %v70, 4294901760
    %633 = vmatpush.msra.mxu0 %v632
    %v634 = vand.u32 %v69, 4294901760
    %635 = vmatpush.msra.mxu0 %v634
    %v636 = vand.u32 %v68, 4294901760
    %637 = vmatpush.msra.mxu0 %v636
    %v638 = vand.u32 %v67, 4294901760
    %639 = vmatpush.msra.mxu0 %v638
    %v640 = vand.u32 %v66, 4294901760
    %641 = vmatpush.msra.mxu0 %v640
    %v642 = vand.u32 %v65, 4294901760
    %643 = vmatpush.msra.mxu0 %v642
    %v644 = vand.u32 %v64, 4294901760
    %645 = vmatpush.msra.mxu0 %v644
    %v646 = vand.u32 %v63, 4294901760
    %647 = vmatpush.msra.mxu0 %v646
    %v648 = vand.u32 %v62, 4294901760
    %649 = vmatpush.msra.mxu0 %v648
    %v650 = vand.u32 %v421, 4294901760
    %v651 = vsub.f32 %v421, %v650
    %v652 = vand.u32 %v651, 4294901760
    %653 = vmatmul.f32.gmra.mxu0 %v652
    %v654 = vpop.f32.mrf.mxu0
    %v655 = vadd.f32 %v616, %v654
    %656 = vdwg.mxu0
    %v657 = vand.u32 %v77, 4294901760
    %v658 = vsub.f32 %v77, %v657
    %v659 = vand.u32 %v658, 4294901760
    %660 = vmatpush.msra.mxu0 %v659
    %v661 = vand.u32 %v76, 4294901760
    %v662 = vsub.f32 %v76, %v661
    %v663 = vand.u32 %v662, 4294901760
    %664 = vmatpush.msra.mxu0 %v663
    %v665 = vand.u32 %v75, 4294901760
    %v666 = vsub.f32 %v75, %v665
    %v667 = vand.u32 %v666, 4294901760
    %668 = vmatpush.msra.mxu0 %v667
    %v669 = vand.u32 %v74, 4294901760
    %v670 = vsub.f32 %v74, %v669
    %v671 = vand.u32 %v670, 4294901760
    %672 = vmatpush.msra.mxu0 %v671
    %v673 = vand.u32 %v73, 4294901760
    %v674 = vsub.f32 %v73, %v673
    %v675 = vand.u32 %v674, 4294901760
    %676 = vmatpush.msra.mxu0 %v675
    %v677 = vand.u32 %v72, 4294901760
    %v678 = vsub.f32 %v72, %v677
    %v679 = vand.u32 %v678, 4294901760
    %680 = vmatpush.msra.mxu0 %v679
    %v681 = vand.u32 %v71, 4294901760
    %v682 = vsub.f32 %v71, %v681
    %v683 = vand.u32 %v682, 4294901760
    %684 = vmatpush.msra.mxu0 %v683
    %v685 = vand.u32 %v70, 4294901760
    %v686 = vsub.f32 %v70, %v685
    %v687 = vand.u32 %v686, 4294901760
    %688 = vmatpush.msra.mxu0 %v687
    %v689 = vand.u32 %v69, 4294901760
    %v690 = vsub.f32 %v69, %v689
    %v691 = vand.u32 %v690, 4294901760
    %692 = vmatpush.msra.mxu0 %v691
    %v693 = vand.u32 %v68, 4294901760
    %v694 = vsub.f32 %v68, %v693
    %v695 = vand.u32 %v694, 4294901760
    %696 = vmatpush.msra.mxu0 %v695
    %v697 = vand.u32 %v67, 4294901760
    %v698 = vsub.f32 %v67, %v697
    %v699 = vand.u32 %v698, 4294901760
    %700 = vmatpush.msra.mxu0 %v699
    %v701 = vand.u32 %v66, 4294901760
    %v702 = vsub.f32 %v66, %v701
    %v703 = vand.u32 %v702, 4294901760
    %704 = vmatpush.msra.mxu0 %v703
    %v705 = vand.u32 %v65, 4294901760
    %v706 = vsub.f32 %v65, %v705
    %v707 = vand.u32 %v706, 4294901760
    %708 = vmatpush.msra.mxu0 %v707
    %v709 = vand.u32 %v64, 4294901760
    %v710 = vsub.f32 %v64, %v709
    %v711 = vand.u32 %v710, 4294901760
    %712 = vmatpush.msra.mxu0 %v711
    %v713 = vand.u32 %v63, 4294901760
    %v714 = vsub.f32 %v63, %v713
    %v715 = vand.u32 %v714, 4294901760
    %716 = vmatpush.msra.mxu0 %v715
    %v717 = vand.u32 %v62, 4294901760
    %v718 = vsub.f32 %v62, %v717
    %v719 = vand.u32 %v718, 4294901760
    %720 = vmatpush.msra.mxu0 %v719
    %v721 = vand.u32 %v421, 4294901760
    %722 = vmatmul.f32.gmra.mxu0 %v721
    %v723 = vpop.f32.mrf.mxu0
    %v724 = vadd.f32 %v655, %v723
    %725 = vdwg.mxu0
    %v726 = vand.u32 %v77, 4294901760
    %727 = vmatpush.msra.mxu0 %v726
    %v728 = vand.u32 %v76, 4294901760
    %729 = vmatpush.msra.mxu0 %v728
    %v730 = vand.u32 %v75, 4294901760
    %731 = vmatpush.msra.mxu0 %v730
    %v732 = vand.u32 %v74, 4294901760
    %733 = vmatpush.msra.mxu0 %v732
    %v734 = vand.u32 %v73, 4294901760
    %735 = vmatpush.msra.mxu0 %v734
    %v736 = vand.u32 %v72, 4294901760
    %737 = vmatpush.msra.mxu0 %v736
    %v738 = vand.u32 %v71, 4294901760
    %739 = vmatpush.msra.mxu0 %v738
    %v740 = vand.u32 %v70, 4294901760
    %741 = vmatpush.msra.mxu0 %v740
    %v742 = vand.u32 %v69, 4294901760
    %743 = vmatpush.msra.mxu0 %v742
    %v744 = vand.u32 %v68, 4294901760
    %745 = vmatpush.msra.mxu0 %v744
    %v746 = vand.u32 %v67, 4294901760
    %747 = vmatpush.msra.mxu0 %v746
    %v748 = vand.u32 %v66, 4294901760
    %749 = vmatpush.msra.mxu0 %v748
    %v750 = vand.u32 %v65, 4294901760
    %751 = vmatpush.msra.mxu0 %v750
    %v752 = vand.u32 %v64, 4294901760
    %753 = vmatpush.msra.mxu0 %v752
    %v754 = vand.u32 %v63, 4294901760
    %755 = vmatpush.msra.mxu0 %v754
    %v756 = vand.u32 %v62, 4294901760
    %757 = vmatpush.msra.mxu0 %v756
    %v758 = vand.u32 %v421, 4294901760
    %759 = vmatmul.f32.gmra.mxu0 %v758
    %v760 = vpop.f32.mrf.mxu0
    %v761 = vadd.f32 %v724, %v760
    %762 = vdwg.mxu0
    %v763 = vmul.f32 %v761, 0.03125
    %v764 = vadd.f32 %v763, 1e-12
    %v765 = vrsqrt.pop %v764
    %v766 = vmul.f32 %v765, %v764
    %v767 = vmul.f32 %v766, %v765
    %v768 = vmul.f32 0.5, %v767
    %v769 = vsub.f32 1.5, %v768
    %v770 = vmul.f32 %v765, %v769
    %vm771 = vweird.f32 %v764
    %vm772 = vweird.f32 %v765
    %vm773 = vmor %vm771, %vm772
    %v774 = vsel %vm773, %v765, %v770
    %v775 = vld [vmem:[#allocation5] sm:$0x1]
    %v776 = vmul.f32 %v420, %v774
    %v778 = vperm.slane %v775, 0
    %v780 = vmul.f32 %v778, %v776
    %v781 = vld [vmem:[%s2] sm:$0x1]
    %v783 = vperm.slane %v781, 0
    %v785 = vadd.f32 %v780, %v783
    %786 = vst [vmem:[#allocation8] sm:$0xf] %v785
    // Predicated region
    $region30: #{tpu_custom_call.1} parent=1 // pred_check
      _
    $region31: #{tpu_custom_call.1} parent=1 // pred_check_branch
      %788 = sbr.rel (0) target = $region33
    $region32: #{tpu_custom_call.1} parent=1 // pred_region
      %790 = vsyncadd [#allocation4], 0
      %s792 = sshll.u32 [#allocation8], 4
      %s793 = int_to_ptr.vmem [resolvable:$true] %s792
      %s794 = sshll.u32 %s4, 4
      %s795 = int_to_ptr.hbm [resolvable:$true] %s794
      %797 = dma.vmem_to_hbm [thread:$0]  %s793, 64, %s795, [#allocation4]
    $region33: #{tpu_custom_call.1} parent=1 // pred_fallthru
      _
    // Predicated region
    $region34: #{tpu_custom_call.1} parent=1 // pred_check
      _
    $region35: #{tpu_custom_call.1} parent=1 // pred_check_branch
      %799 = sbr.rel (0) target = $region37
    $region36: #{tpu_custom_call.1} parent=1 // pred_region
      %801 = dma.done [#allocation4], 64
    $region37: #{tpu_custom_call.1} parent=1 // pred_fallthru
      _
    %802 = vsyncpa [#allocation3], 1
    %803 = vsyncpa [#allocation6], 1
    %804 = vsyncpa [#allocation4], 1

// kernel: tpu_custom_call.1
$region0: #{tpu_custom_call.1}
  #allocation0 [shape = 'u32[]', space=smem, size = 0x4, offset = 0x4, fixed_abs, tag = 'smem constant byte address 0x4 - core index']
  #allocation1 [shape = 'u32[72,128]{1,0:T(1,128)}', space=vmem, size = 0x9000, scoped, tag = 'internal scratch']
  %s0 = inlined_call_operand.hbm [shape: f32[16,32], index: 0, kind: input, shape index: {}]
  %s1 = inlined_call_operand.hbm [shape: f32[1,32], index: 1, kind: input, shape index: {}]
  %s2 = inlined_call_operand.vmem [shape: f32[1,32], index: 2, kind: input, shape index: {}]
  %s3 = inlined_call_operand.hbm [shape: f32[16,32], index: 3, kind: output, shape index: {}]
  %s4 = sld [smem:[#allocation0]]
  $region30: #{tpu_custom_call.1} parent=0
    _
  %s6 = ssub.s32 1, %s4
  %s7 = scalar_select 0, %s6, %s4
  $region1: #{tpu_custom_call.1} parent=0
    #allocation2 [shape = 'u8[8192]{0}', space=vmem, size = 0x2000, scoped, tag = 'input window, operand 0, single buffered']
    #allocation3 [shape = 's32[1]{0}', space=sflag, size = 0x4, scoped, tag = 'scoped memory for tpu_custom_call.1']
    #allocation4 [shape = 's32[1]{0}', space=sflag, size = 0x4, scoped, tag = 'scoped memory for tpu_custom_call.1']
    #allocation5 [shape = 'u8[512]{0}', space=vmem, size = 0x400, scoped, tag = 'input window, operand 1, single buffered']
    #allocation6 [shape = 's32[1]{0}', space=sflag, size = 0x4, scoped, tag = 'scoped memory for tpu_custom_call.1']
    #allocation7 [shape = 'u8[8192]{0}', space=vmem, size = 0x2000, scoped, tag = 'output window, operand 0, single buffered']
    %8 = vsyncpa [#allocation3], 0
    %9 = vsyncpa [#allocation6], 0
    %10 = vsyncpa [#allocation4], 0
    // Predicated region
    $region2: #{tpu_custom_call.1} parent=1 // pred_check
      _
    $region3: #{tpu_custom_call.1} parent=1 // pred_check_branch
      %12 = sbr.rel (0) target = $region5
    $region4: #{tpu_custom_call.1} parent=1 // pred_region
      %s13 = smul.u32 2, %s7
      %15 = vsyncadd [#allocation3], 0
      %s16 = smul.addr %s13, 8
      %s17 = scalar_lea.hbm %s0, %s16
      %s18 = sshll.u32 %s17, 4
      %s19 = int_to_ptr.hbm [resolvable:$true] %s18
      %s20 = sshll.u32 [#allocation2], 4
      %s21 = int_to_ptr.vmem [resolvable:$true] %s20
      %26 = dma.hbm_to_vmem [thread:$0]  %s19, 256, %s21, [#allocation3], 128, 128, 8
    $region5: #{tpu_custom_call.1} parent=1 // pred_fallthru
      _
    // Predicated region
    $region6: #{tpu_custom_call.1} parent=1 // pred_check
      _
    $region7: #{tpu_custom_call.1} parent=1 // pred_check_branch
      %28 = sbr.rel (0) target = $region9
    $region8: #{tpu_custom_call.1} parent=1 // pred_region
      %30 = vsyncadd [#allocation6], 0
      %s32 = sshll.u32 %s1, 4
      %s33 = int_to_ptr.hbm [resolvable:$true] %s32
      %s34 = sshll.u32 [#allocation5], 4
      %s35 = int_to_ptr.vmem [resolvable:$true] %s34
      %37 = dma.hbm_to_vmem [thread:$0]  %s33, 16, %s35, [#allocation6]
    $region9: #{tpu_custom_call.1} parent=1 // pred_fallthru
      _
    // Predicated region
    $region10: #{tpu_custom_call.1} parent=1 // pred_check
      _
    $region11: #{tpu_custom_call.1} parent=1 // pred_check_branch
      %39 = sbr.rel (0) target = $region13
    $region12: #{tpu_custom_call.1} parent=1 // pred_region
      _
    $region13: #{tpu_custom_call.1} parent=1 // pred_fallthru
      _
    // Predicated region
    $region14: #{tpu_custom_call.1} parent=1 // pred_check
      _
    $region15: #{tpu_custom_call.1} parent=1 // pred_check_branch
      %41 = sbr.rel (0) target = $region17
    $region16: #{tpu_custom_call.1} parent=1 // pred_region
      %43 = dma.done [#allocation3], 256
    $region17: #{tpu_custom_call.1} parent=1 // pred_fallthru
      _
    // Predicated region
    $region18: #{tpu_custom_call.1} parent=1 // pred_check
      _
    $region19: #{tpu_custom_call.1} parent=1 // pred_check_branch
      %45 = sbr.rel (0) target = $region21
    $region20: #{tpu_custom_call.1} parent=1 // pred_region
      %47 = dma.done [#allocation6], 16
    $region21: #{tpu_custom_call.1} parent=1 // pred_fallthru
      _
    %s48 = smul.u32 2, %s7
    %s49 = smul.u32 2, %s7
    %v50 = vld [vmem:[#allocation2] sm:$0xff]
    %v51 = vld [vmem:[#allocation2 + $0x8] sm:$0xff]
    %vm52 = vcmask 261120
    %v53 = vsel %vm52, %v50, 0.0
    %54 = vadd.xlane.f32.xlu0 %v53
    %v55 = vpop.xlane.xlu0 %54
    %v56 = vsel %vm52, %v51, 0.0
    %57 = vadd.xlane.f32.xlu0 %v56
    %v58 = vpop.xlane.xlu0 %57
    %v59 = vmul.f32 %v55, 0.03125
    %v60 = vmul.f32 %v58, 0.03125
    %v61 = vsub.f32 %v50, %v59
    %v62 = vsub.f32 %v51, %v60
    %v63 = vmul.f32 %v61, %v61
    %v64 = vmul.f32 %v62, %v62
    %v65 = vsel %vm52, %v63, 0.0
    %66 = vadd.xlane.f32.xlu0 %v65
    %v67 = vpop.xlane.xlu0 %66
    %v68 = vsel %vm52, %v64, 0.0
    %69 = vadd.xlane.f32.xlu0 %v68
    %v70 = vpop.xlane.xlu0 %69
    %v71 = vmul.f32 %v67, 0.03125
    %v72 = vmul.f32 %v70, 0.03125
    %v73 = vadd.f32 %v71, 1e-12
    %v74 = vadd.f32 %v72, 1e-12
    %v75 = vrsqrt.pop %v73
    %v76 = vmul.f32 %v75, %v73
    %v77 = vmul.f32 %v76, %v75
    %v78 = vmul.f32 0.5, %v77
    %v79 = vsub.f32 1.5, %v78
    %v80 = vmul.f32 %v75, %v79
    %vm81 = vweird.f32 %v73
    %vm82 = vweird.f32 %v75
    %vm83 = vmor %vm81, %vm82
    %v84 = vsel %vm83, %v75, %v80
    %v85 = vrsqrt.pop %v74
    %v86 = vmul.f32 %v85, %v74
    %v87 = vmul.f32 %v86, %v85
    %v88 = vmul.f32 0.5, %v87
    %v89 = vsub.f32 1.5, %v88
    %v90 = vmul.f32 %v85, %v89
    %vm91 = vweird.f32 %v74
    %vm92 = vweird.f32 %v85
    %vm93 = vmor %vm91, %vm92
    %v94 = vsel %vm93, %v85, %v90
    %v95 = vld [vmem:[#allocation5] sm:$0x1]
    %v96 = vmul.f32 %v61, %v84
    %v97 = vmul.f32 %v62, %v94
    %v99 = vperm.slane %v95, 0
    %v101 = vmul.f32 %v99, %v96
    %v102 = vmul.f32 %v99, %v97
    %v103 = vld [vmem:[%s2] sm:$0x1]
    %v105 = vperm.slane %v103, 0
    %v107 = vadd.f32 %v101, %v105
    %v108 = vadd.f32 %v102, %v105
    %109 = vst.msk [vmem:[#allocation7] sm:$0xff] %vm52, %v107
    %110 = vst.msk [vmem:[#allocation7 + $0x8] sm:$0xff] %vm52, %v108
    // Predicated region
    $region22: #{tpu_custom_call.1} parent=1 // pred_check
      _
    $region23: #{tpu_custom_call.1} parent=1 // pred_check_branch
      %112 = sbr.rel (0) target = $region25
    $region24: #{tpu_custom_call.1} parent=1 // pred_region
      %s113 = smul.u32 2, %s7
      %115 = vsyncadd [#allocation4], 0
      %s116 = smul.addr %s113, 8
      %s117 = scalar_lea.hbm %s3, %s116
      %s118 = sshll.u32 [#allocation7], 4
      %s119 = int_to_ptr.vmem [resolvable:$true] %s118
      %s120 = sshll.u32 %s117, 4
      %s121 = int_to_ptr.hbm [resolvable:$true] %s120
      %126 = dma.vmem_to_hbm [thread:$0]  %s119, 256, %s121, [#allocation4], 128, 128, 8
    $region25: #{tpu_custom_call.1} parent=1 // pred_fallthru
      _
    // Predicated region
    $region26: #{tpu_custom_call.1} parent=1 // pred_check
      _
    $region27: #{tpu_custom_call.1} parent=1 // pred_check_branch
      %128 = sbr.rel (0) target = $region29
    $region28: #{tpu_custom_call.1} parent=1 // pred_region
      %130 = dma.done [#allocation4], 256
    $region29: #{tpu_custom_call.1} parent=1 // pred_fallthru
      _
    %131 = vsyncpa [#allocation3], 1
    %132 = vsyncpa [#allocation6], 1
    %133 = vsyncpa [#allocation4], 1

// kernel: tpu_custom_call.1
$region0: #{tpu_custom_call.1}
  #allocation0 [shape = 'u32[]', space=smem, size = 0x4, offset = 0x4, fixed_abs, tag = 'smem constant byte address 0x4 - core index']
  #allocation1 [shape = 'u32[72,128]{1,0:T(1,128)}', space=vmem, size = 0x9000, scoped, tag = 'internal scratch']
  %s0 = inlined_call_operand.hbm [shape: f32[16,32], index: 0, kind: input, shape index: {}]
  %s1 = inlined_call_operand.hbm [shape: f32[1,32], index: 1, kind: input, shape index: {}]
  %s2 = inlined_call_operand.vmem [shape: f32[1,32], index: 2, kind: input, shape index: {}]
  %s3 = inlined_call_operand.hbm [shape: f32[16,32], index: 3, kind: output, shape index: {}]
  %s4 = sld [smem:[#allocation0]]
  $region30: #{tpu_custom_call.1} parent=0
    _
  %s6 = ssub.s32 1, %s4
  %s7 = scalar_select 0, %s6, %s4
  $region1: #{tpu_custom_call.1} parent=0
    #allocation2 [shape = 'u8[8192]{0}', space=vmem, size = 0x2000, scoped, tag = 'input window, operand 0, single buffered']
    #allocation3 [shape = 's32[1]{0}', space=sflag, size = 0x4, scoped, tag = 'scoped memory for tpu_custom_call.1']
    #allocation4 [shape = 's32[1]{0}', space=sflag, size = 0x4, scoped, tag = 'scoped memory for tpu_custom_call.1']
    #allocation5 [shape = 'u8[512]{0}', space=vmem, size = 0x400, scoped, tag = 'input window, operand 1, single buffered']
    #allocation6 [shape = 's32[1]{0}', space=sflag, size = 0x4, scoped, tag = 'scoped memory for tpu_custom_call.1']
    #allocation7 [shape = 'u8[8192]{0}', space=vmem, size = 0x2000, scoped, tag = 'output window, operand 0, single buffered']
    %8 = vsyncpa [#allocation3], 0
    %9 = vsyncpa [#allocation6], 0
    %10 = vsyncpa [#allocation4], 0
    // Predicated region
    $region2: #{tpu_custom_call.1} parent=1 // pred_check
      _
    $region3: #{tpu_custom_call.1} parent=1 // pred_check_branch
      %12 = sbr.rel (0) target = $region5
    $region4: #{tpu_custom_call.1} parent=1 // pred_region
      %14 = vsyncadd [#allocation3], 0
      %s15 = sshll.u32 %s0, 4
      %s16 = int_to_ptr.hbm [resolvable:$true] %s15
      %s17 = sshll.u32 [#allocation2], 4
      %s18 = int_to_ptr.vmem [resolvable:$true] %s17
      %23 = dma.hbm_to_vmem [thread:$0]  %s16, 256, %s18, [#allocation3], 128, 128, 8
    $region5: #{tpu_custom_call.1} parent=1 // pred_fallthru
      _
    // Predicated region
    $region6: #{tpu_custom_call.1} parent=1 // pred_check
      _
    $region7: #{tpu_custom_call.1} parent=1 // pred_check_branch
      %25 = sbr.rel (0) target = $region9
    $region8: #{tpu_custom_call.1} parent=1 // pred_region
      %27 = vsyncadd [#allocation6], 0
      %s29 = sshll.u32 %s1, 4
      %s30 = int_to_ptr.hbm [resolvable:$true] %s29
      %s31 = sshll.u32 [#allocation5], 4
      %s32 = int_to_ptr.vmem [resolvable:$true] %s31
      %34 = dma.hbm_to_vmem [thread:$0]  %s30, 16, %s32, [#allocation6]
    $region9: #{tpu_custom_call.1} parent=1 // pred_fallthru
      _
    // Predicated region
    $region10: #{tpu_custom_call.1} parent=1 // pred_check
      _
    $region11: #{tpu_custom_call.1} parent=1 // pred_check_branch
      %36 = sbr.rel (0) target = $region13
    $region12: #{tpu_custom_call.1} parent=1 // pred_region
      _
    $region13: #{tpu_custom_call.1} parent=1 // pred_fallthru
      _
    // Predicated region
    $region14: #{tpu_custom_call.1} parent=1 // pred_check
      _
    $region15: #{tpu_custom_call.1} parent=1 // pred_check_branch
      %38 = sbr.rel (0) target = $region17
    $region16: #{tpu_custom_call.1} parent=1 // pred_region
      %40 = dma.done [#allocation3], 256
    $region17: #{tpu_custom_call.1} parent=1 // pred_fallthru
      _
    // Predicated region
    $region18: #{tpu_custom_call.1} parent=1 // pred_check
      _
    $region19: #{tpu_custom_call.1} parent=1 // pred_check_branch
      %42 = sbr.rel (0) target = $region21
    $region20: #{tpu_custom_call.1} parent=1 // pred_region
      %44 = dma.done [#allocation6], 16
    $region21: #{tpu_custom_call.1} parent=1 // pred_fallthru
      _
    %v45 = vld [vmem:[#allocation2] sm:$0xff]
    %v46 = vld [vmem:[#allocation2 + $0x8] sm:$0xff]
    %vm47 = vcmask 261120
    %v48 = vsel %vm47, %v45, 0.0
    %49 = vadd.xlane.f32.xlu0 %v48
    %v50 = vpop.xlane.xlu0 %49
    %v51 = vsel %vm47, %v46, 0.0
    %52 = vadd.xlane.f32.xlu0 %v51
    %v53 = vpop.xlane.xlu0 %52
    %v54 = vmul.f32 %v50, 0.03125
    %v55 = vmul.f32 %v53, 0.03125
    %v56 = vsub.f32 %v45, %v54
    %v57 = vsub.f32 %v46, %v55
    %v58 = vmul.f32 %v56, %v56
    %v59 = vmul.f32 %v57, %v57
    %v60 = vsel %vm47, %v58, 0.0
    %61 = vadd.xlane.f32.xlu0 %v60
    %v62 = vpop.xlane.xlu0 %61
    %v63 = vsel %vm47, %v59, 0.0
    %64 = vadd.xlane.f32.xlu0 %v63
    %v65 = vpop.xlane.xlu0 %64
    %v66 = vmul.f32 %v62, 0.03125
    %v67 = vmul.f32 %v65, 0.03125
    %v68 = vadd.f32 %v66, 1e-12
    %v69 = vadd.f32 %v67, 1e-12
    %v70 = vrsqrt.pop %v68
    %v71 = vmul.f32 %v70, %v68
    %v72 = vmul.f32 %v71, %v70
    %v73 = vmul.f32 0.5, %v72
    %v74 = vsub.f32 1.5, %v73
    %v75 = vmul.f32 %v70, %v74
    %vm76 = vweird.f32 %v68
    %vm77 = vweird.f32 %v70
    %vm78 = vmor %vm76, %vm77
    %v79 = vsel %vm78, %v70, %v75
    %v80 = vrsqrt.pop %v69
    %v81 = vmul.f32 %v80, %v69
    %v82 = vmul.f32 %v81, %v80
    %v83 = vmul.f32 0.5, %v82
    %v84 = vsub.f32 1.5, %v83
    %v85 = vmul.f32 %v80, %v84
    %vm86 = vweird.f32 %v69
    %vm87 = vweird.f32 %v80
    %vm88 = vmor %vm86, %vm87
    %v89 = vsel %vm88, %v80, %v85
    %v90 = vld [vmem:[#allocation5] sm:$0x1]
    %v91 = vmul.f32 %v56, %v79
    %v92 = vmul.f32 %v57, %v89
    %v94 = vperm.slane %v90, 0
    %v96 = vmul.f32 %v94, %v91
    %v97 = vmul.f32 %v94, %v92
    %v98 = vld [vmem:[%s2] sm:$0x1]
    %v100 = vperm.slane %v98, 0
    %v102 = vadd.f32 %v96, %v100
    %v103 = vadd.f32 %v97, %v100
    %104 = vst.msk [vmem:[#allocation7] sm:$0xff] %vm47, %v102
    %105 = vst.msk [vmem:[#allocation7 + $0x8] sm:$0xff] %vm47, %v103
    // Predicated region
    $region22: #{tpu_custom_call.1} parent=1 // pred_check
      _
    $region23: #{tpu_custom_call.1} parent=1 // pred_check_branch
      %107 = sbr.rel (0) target = $region25
    $region24: #{tpu_custom_call.1} parent=1 // pred_region
      %109 = vsyncadd [#allocation4], 0
      %s110 = sshll.u32 [#allocation7], 4
      %s111 = int_to_ptr.vmem [resolvable:$true] %s110
      %s112 = sshll.u32 %s3, 4
      %s113 = int_to_ptr.hbm [resolvable:$true] %s112
      %118 = dma.vmem_to_hbm [thread:$0]  %s111, 256, %s113, [#allocation4], 128, 128, 8
    $region25: #{tpu_custom_call.1} parent=1 // pred_fallthru
      _
    // Predicated region
    $region26: #{tpu_custom_call.1} parent=1 // pred_check
      _
    $region27: #{tpu_custom_call.1} parent=1 // pred_check_branch
      %120 = sbr.rel (0) target = $region29
    $region28: #{tpu_custom_call.1} parent=1 // pred_region
      %122 = dma.done [#allocation4], 256
    $region29: #{tpu_custom_call.1} parent=1 // pred_fallthru
      _
    %123 = vsyncpa [#allocation3], 1
    %124 = vsyncpa [#allocation6], 1
    %125 = vsyncpa [#allocation4], 1

</llo_original>
